<compile_context>
chip_gen: v6e
topology: v6e:2x2x1
jax: 0.10.0
libtpu: 0.0.40
codegen_flags: <defaults>
</compile_context>

<pallas_src>
import jax
import jax.numpy as jnp
from jax import lax
from jax.experimental import pallas as pl
from jax.experimental.pallas import tpu as pltpu  # noqa: F401

# ----------------------------- configuration --------------------------------
DIM = 64
N_HEADS = 4
HEAD_DIM = DIM // N_HEADS
SEQ = 16
BATCH = 2
CAUSAL = True
RESIDUAL_SCALE = 0.5
RMS_EPS = 1e-5
SM_SCALE = 1.0 / (HEAD_DIM ** 0.5)


# ------------------------------- the kernel ---------------------------------
def transformer_block_kernel(
    x_ref,       # (B*S, D)        f32 activations, batch fused into rows
    cs_ref,      # (B*S, 4*DH)     f32 [cos|cos|sin|sin] rotary slab
    bias_ref,    # (B*S, B*S)      f32 additive block-diag + causal bias
    w3_ref,      # (H, D, 5*DH)    bf16 per-head [Q|K|rotQ|rotK|V] (pre-folded)
    wout3_ref,   # (H, DH, D)      bf16 residual_scale * per-head out-proj
    wfc1_ref,    # (D, 4D)         bf16 diag(g2) @ fc1.weight.T
    wfc2_ref,    # (4D, D)         bf16 residual_scale * fc2.weight.T
    o_ref,       # (B*S, D)
):
    BS, D = x_ref.shape
    H = w3_ref.shape[0]
    DH = w3_ref.shape[2] // 5

    x = x_ref[...]                                         # f32
    x_skip = x

    # ---- RMSNorm 1 (gain g1 folded into w3) ----
    xn = x * lax.rsqrt(jnp.mean(x * x, axis=-1, keepdims=True) + RMS_EPS)
    xn_b = jnp.broadcast_to(xn.astype(jnp.bfloat16), (H, BS, D))

    # ---- head-batched fused projection: [q | k | rothalf(q) | rothalf(k) | v]
    qkv = jnp.einsum('hmd,hdk->hmk', xn_b, w3_ref[...],
                     preferred_element_type=jnp.float32)   # (H, BS, 5*DH)

    # ---- rotary (rotate_half pre-baked into weight columns): 2 muls + 1 add
    cs = cs_ref[...]                                       # (BS, 4*DH)
    qk = (qkv[:, :, :2 * DH] * cs[:, :2 * DH]
          + qkv[:, :, 2 * DH:4 * DH] * cs[:, 2 * DH:])     # (H, BS, 2*DH)

    q = qk[:, :, :DH].astype(jnp.bfloat16)                 # SM_SCALE pre-folded
    k = qk[:, :, DH:].astype(jnp.bfloat16)
    v = qkv[:, :, 4 * DH:].astype(jnp.bfloat16)

    # ---- head-batched attention with precomputed additive bias ----
    s = jnp.einsum('hqd,hkd->hqk', q, k,
                   preferred_element_type=jnp.float32)     # (H, BS, BS)
    s = s + bias_ref[...]                                  # block-diag + causal
    m = jnp.max(s, axis=-1, keepdims=True)
    p = jnp.exp(s - m)
    inv_l = pl.reciprocal(jnp.sum(p, axis=-1, keepdims=True), approx=True)
    pv = jnp.einsum('hqk,hkd->hqd', p.astype(jnp.bfloat16), v,
                    preferred_element_type=jnp.float32)
    a = (pv * inv_l).astype(jnp.bfloat16)                  # (H, BS, DH)

    # ---- attention out-projection + residual (residual_scale pre-folded) ----
    proj = jnp.einsum('hmd,hdn->hmn', a, wout3_ref[...],
                      preferred_element_type=jnp.float32)  # (H, BS, D)
    x = x_skip + jnp.sum(proj, axis=0)
    x_skip2 = x

    # ---- RMSNorm 2 (gain g2 folded into wfc1) ----
    xn2 = x * lax.rsqrt(jnp.mean(x * x, axis=-1, keepdims=True) + RMS_EPS)

    # ---- MLP: fc1 -> gelu(tanh) -> fc2 (+ residual, scale pre-folded) ----
    h1 = jnp.dot(xn2.astype(jnp.bfloat16), wfc1_ref[...],
                 preferred_element_type=jnp.float32)       # (BS, 4D)
    h1 = jax.nn.gelu(h1, approximate=True)
    x = x_skip2 + jnp.dot(h1.astype(jnp.bfloat16), wfc2_ref[...],
                          preferred_element_type=jnp.float32)

    o_ref[...] = x.astype(o_ref.dtype)


# ------------------------- one-time parameter prep ---------------------------
def _rothalf_matrix(dim, head_dim):
    """R such that q @ R == rotate_half(q) per head: [q1, q2] -> [-q2, q1]."""
    half = head_dim // 2
    blk = jnp.block([
        [jnp.zeros((half, half), jnp.float32), jnp.eye(half, dtype=jnp.float32)],
        [-jnp.eye(half, dtype=jnp.float32), jnp.zeros((half, half), jnp.float32)],
    ])
    return jnp.kron(jnp.eye(dim // head_dim, dtype=jnp.float32), blk)


def prepare_params(cos, sin, g1, g2, w_qkv, w_out, w_fc1, w_fc2, batch, seq):
    """Fold gains / scales / rotate_half into bf16 weight slabs and build the
    rotary slab + additive mask bias.  Runs ONCE, outside the per-call jit."""
    D, H, DH = DIM, N_HEADS, HEAD_DIM

    wq = SM_SCALE * (g1[:, None] * w_qkv[:D].T)            # (D, D)
    wk = g1[:, None] * w_qkv[D:2 * D].T
    wv = g1[:, None] * w_qkv[2 * D:].T
    R = _rothalf_matrix(D, DH)

    def heads(w):                                          # (D, D) -> (H, D, DH)
        return jnp.transpose(w.reshape(D, H, DH), (1, 0, 2))

    w3 = jnp.concatenate(
        [heads(wq), heads(wk), heads(wq @ R), heads(wk @ R), heads(wv)],
        axis=2).astype(jnp.bfloat16)                       # (H, D, 5*DH)
    wout3 = (RESIDUAL_SCALE * w_out.T).reshape(H, DH, D).astype(jnp.bfloat16)
    wfc1 = (g2[:, None] * w_fc1.T).astype(jnp.bfloat16)    # (D, 4D)
    wfc2 = (RESIDUAL_SCALE * w_fc2.T).astype(jnp.bfloat16)  # (4D, D)

    # rotary slab (B*S, 4*DH): [cos|cos|sin|sin], per-head value cos[s, d % (DH//2)]
    cos_dh = jnp.concatenate([cos, cos], axis=1)           # (S, DH)
    sin_dh = jnp.concatenate([sin, sin], axis=1)
    cs = jnp.tile(jnp.concatenate([cos_dh, cos_dh, sin_dh, sin_dh], axis=1),
                  (batch, 1)).astype(jnp.float32)          # (B*S, 4*DH)

    # additive block-diagonal (+ causal) bias over fused rows
    r = jnp.arange(batch * seq)
    ok = (r[:, None] // seq) == (r[None, :] // seq)
    if CAUSAL:
        ok = ok & (r[None, :] <= r[:, None])
    bias = jnp.where(ok, 0.0, -1e30).astype(jnp.float32)   # (B*S, B*S)

    return cs, bias, w3, wout3, wfc1, wfc2


# ------------------------------- jitted call ----------------------------------
@jax.jit
def transformer_block(x, cs, bias, w3, wout3, wfc1, wfc2):
    """x: (B, S, D). All other args are the pre-folded constants."""
    B, S, D = x.shape
    x2 = x.reshape(B * S, D)
    out = pl.pallas_call(
        transformer_block_kernel,
        out_shape=jax.ShapeDtypeStruct((B * S, D), x.dtype),
    )(x2, cs, bias, w3, wout3, wfc1, wfc2)
    return out.reshape(B, S, D)


# --------------------------- pure-JAX reference -------------------------------
def reference(x, cos, sin, g1, g2, w_qkv, w_out, w_fc1, w_fc2):
    B, S, D = x.shape
    DH = HEAD_DIM

    def rms(v, g):
        return v * jax.lax.rsqrt(jnp.mean(v * v, -1, keepdims=True) + RMS_EPS) * g

    x_skip = x
    xn = rms(x, g1)
    qkv = xn @ w_qkv.T                                     # (B, S, 3D)
    qkv = qkv.reshape(B, S, 3, N_HEADS, DH)
    cos_f = jnp.concatenate([cos, cos], -1)[None, :, None, :]   # (1,S,1,DH)
    sin_f = jnp.concatenate([sin, sin], -1)[None, :, None, :]

    def rot(t):
        t1, t2 = t[..., :DH // 2], t[..., DH // 2:]
        return t * cos_f + jnp.concatenate([-t2, t1], -1) * sin_f

    q = rot(qkv[:, :, 0]); k = rot(qkv[:, :, 1]); v = qkv[:, :, 2]
    scores = jnp.einsum("bqhd,bkhd->bhqk", q, k) * SM_SCALE
    if CAUSAL:
        mask = jnp.tril(jnp.ones((S, S), bool))
        scores = jnp.where(mask[None, None], scores, -1e30)
    p = jax.nn.softmax(scores, axis=-1)
    a = jnp.einsum("bhqk,bkhd->bqhd", p, v).reshape(B, S, D)

    x = x_skip + RESIDUAL_SCALE * (a @ w_out.T)
    x_skip2 = x
    xn2 = rms(x, g2)
    h = jax.nn.gelu(xn2 @ w_fc1.T, approximate=True)
    return x_skip2 + RESIDUAL_SCALE * (h @ w_fc2.T)


# ----------------------------------- main -------------------------------------
if __name__ == "__main__":
    key = jax.random.PRNGKey(0)
    kx, k1, k2, k3, k4, k5, k6 = jax.random.split(key, 7)

    x = jax.random.normal(kx, (BATCH, SEQ, DIM), jnp.float32)

    # deterministic parameter init (synthetic, not a checkpoint)
    w_qkv = 0.02 * jax.random.normal(k1, (3 * DIM, DIM), jnp.float32)
    w_out = 0.02 * jax.random.normal(k2, (DIM, DIM), jnp.float32)
    w_fc1 = 0.02 * jax.random.normal(k3, (4 * DIM, DIM), jnp.float32)
    w_fc2 = 0.02 * jax.random.normal(k4, (DIM, 4 * DIM), jnp.float32)
    g1 = 1.0 + 0.1 * jax.random.normal(k5, (DIM,), jnp.float32)
    g2 = 1.0 + 0.1 * jax.random.normal(k6, (DIM,), jnp.float32)

    # rotary cos/sin tables, shape (S, head_dim//2)
    inv_freq = 1.0 / (10000.0 ** (jnp.arange(0, HEAD_DIM, 2, dtype=jnp.float32) / HEAD_DIM))
    freqs = jnp.arange(SEQ, dtype=jnp.float32)[:, None] * inv_freq[None, :]
    cos, sin = jnp.cos(freqs), jnp.sin(freqs)

    # one-time folding (outside the per-step jitted path)
    params = prepare_params(cos, sin, g1, g2, w_qkv, w_out, w_fc1, w_fc2, BATCH, SEQ)
    params = tuple(jax.block_until_ready(p) for p in params)

    out = transformer_block(x, *params)
    out = jax.block_until_ready(out)

    ref = reference(x, cos, sin, g1, g2, w_qkv, w_out, w_fc1, w_fc2)
    assert out.shape == (BATCH, SEQ, DIM)
    err = float(jnp.max(jnp.abs(out - ref)))
    # bf16 MXU operands vs f32 reference -> tolerance loosened accordingly
    assert jnp.allclose(out, ref, atol=2e-3, rtol=2e-3), err
    print("KERNEL_OK")
</pallas_src>

<mosaic_0001>
module attributes {stable_mosaic.version = 11 : i64} {
  func.func @transformer_block_kernel(%arg0: memref<32x64xf32, #tpu.memory_space<vmem>>, %arg1: memref<32x64xf32, #tpu.memory_space<vmem>>, %arg2: memref<32x32xf32, #tpu.memory_space<vmem>>, %arg3: memref<4x64x80xbf16, #tpu.memory_space<vmem>>, %arg4: memref<4x16x64xbf16, #tpu.memory_space<vmem>>, %arg5: memref<64x256xbf16, #tpu.memory_space<vmem>>, %arg6: memref<256x64xbf16, #tpu.memory_space<vmem>>, %arg7: memref<32x64xf32, #tpu.memory_space<vmem>>) attributes {dimension_semantics = [], scalar_prefetch = 0 : i64, scratch_operands = 0 : i64, tpu.core_type = #tpu.core_type<tc>} {
    %c0 = arith.constant 0 : index
    %c0_0 = arith.constant 0 : index
    %0 = vector.load %arg0[%c0, %c0_0] : memref<32x64xf32, #tpu.memory_space<vmem>>, vector<32x64xf32>
    %1 = arith.mulf %0, %0 : vector<32x64xf32>
    %cst = arith.constant dense<0.000000e+00> : vector<32xf32>
    %2 = vector.multi_reduction <add>, %1, %cst [1] : vector<32x64xf32> to vector<32xf32>
    %3 = vector.shape_cast %2 : vector<32xf32> to vector<32x1xf32>
    %cst_1 = arith.constant 6.400000e+01 : f32
    %4 = vector.broadcast %cst_1 : f32 to vector<32x1xf32>
    %5 = arith.divf %3, %4 : vector<32x1xf32>
    %cst_2 = arith.constant 9.99999974E-6 : f32
    %6 = vector.broadcast %cst_2 : f32 to vector<32x1xf32>
    %7 = arith.addf %5, %6 : vector<32x1xf32>
    %8 = math.rsqrt %7 : vector<32x1xf32>
    %9 = vector.broadcast %8 : vector<32x1xf32> to vector<32x64xf32>
    %10 = arith.mulf %0, %9 : vector<32x64xf32>
    %11 = arith.truncf %10 : vector<32x64xf32> to vector<32x64xbf16>
    %12 = vector.shape_cast %11 : vector<32x64xbf16> to vector<1x32x64xbf16>
    %13 = vector.broadcast %12 : vector<1x32x64xbf16> to vector<4x32x64xbf16>
    %c0_3 = arith.constant 0 : index
    %c0_4 = arith.constant 0 : index
    %c0_5 = arith.constant 0 : index
    %14 = vector.load %arg3[%c0_3, %c0_4, %c0_5] : memref<4x64x80xbf16, #tpu.memory_space<vmem>>, vector<4x64x80xbf16>
    "tpu.trace_start"() <{level = 10 : i32, message = "hmd,hdk->hmk"}> : () -> ()
    %cst_6 = arith.constant dense<0.000000e+00> : vector<4x32x80xf32>
    %15 = tpu.matmul %13, %14, %cst_6 {dimension_numbers = #tpu.dot_dimension_numbers<[2], [1], [1], [2], [0, 0, 0, 1, 1, 2], [0], [0]>} : vector<4x32x64xbf16>, vector<4x64x80xbf16>, vector<4x32x80xf32> -> vector<4x32x80xf32>
    "tpu.trace_stop"() : () -> ()
    %c0_7 = arith.constant 0 : index
    %c0_8 = arith.constant 0 : index
    %16 = vector.load %arg1[%c0_7, %c0_8] : memref<32x64xf32, #tpu.memory_space<vmem>>, vector<32x64xf32>
    %17 = vector.extract_strided_slice %15 {offsets = [0, 0, 0], sizes = [4, 32, 32], strides = [1, 1, 1]} : vector<4x32x80xf32> to vector<4x32x32xf32>
    %18 = vector.extract_strided_slice %16 {offsets = [0, 0], sizes = [32, 32], strides = [1, 1]} : vector<32x64xf32> to vector<32x32xf32>
    %19 = vector.shape_cast %18 : vector<32x32xf32> to vector<1x32x32xf32>
    %20 = vector.broadcast %19 : vector<1x32x32xf32> to vector<4x32x32xf32>
    %21 = arith.mulf %17, %20 : vector<4x32x32xf32>
    %22 = vector.extract_strided_slice %15 {offsets = [0, 0, 32], sizes = [4, 32, 32], strides = [1, 1, 1]} : vector<4x32x80xf32> to vector<4x32x32xf32>
    %23 = vector.extract_strided_slice %16 {offsets = [0, 32], sizes = [32, 32], strides = [1, 1]} : vector<32x64xf32> to vector<32x32xf32>
    %24 = vector.shape_cast %23 : vector<32x32xf32> to vector<1x32x32xf32>
    %25 = vector.broadcast %24 : vector<1x32x32xf32> to vector<4x32x32xf32>
    %26 = arith.mulf %22, %25 : vector<4x32x32xf32>
    %27 = arith.addf %21, %26 : vector<4x32x32xf32>
    %28 = vector.extract_strided_slice %27 {offsets = [0, 0, 0], sizes = [4, 32, 16], strides = [1, 1, 1]} : vector<4x32x32xf32> to vector<4x32x16xf32>
    %29 = arith.truncf %28 : vector<4x32x16xf32> to vector<4x32x16xbf16>
    %30 = vector.extract_strided_slice %27 {offsets = [0, 0, 16], sizes = [4, 32, 16], strides = [1, 1, 1]} : vector<4x32x32xf32> to vector<4x32x16xf32>
    %31 = arith.truncf %30 : vector<4x32x16xf32> to vector<4x32x16xbf16>
    %32 = vector.extract_strided_slice %15 {offsets = [0, 0, 64], sizes = [4, 32, 16], strides = [1, 1, 1]} : vector<4x32x80xf32> to vector<4x32x16xf32>
    %33 = arith.truncf %32 : vector<4x32x16xf32> to vector<4x32x16xbf16>
    "tpu.trace_start"() <{level = 10 : i32, message = "hqd,hkd->hqk"}> : () -> ()
    %cst_9 = arith.constant dense<0.000000e+00> : vector<4x32x32xf32>
    %34 = tpu.matmul %29, %31, %cst_9 {dimension_numbers = #tpu.dot_dimension_numbers<[2], [2], [1], [1], [0, 0, 0, 1, 1, 1], [0], [0]>} : vector<4x32x16xbf16>, vector<4x32x16xbf16>, vector<4x32x32xf32> -> vector<4x32x32xf32>
    "tpu.trace_stop"() : () -> ()
    %c0_10 = arith.constant 0 : index
    %c0_11 = arith.constant 0 : index
    %35 = vector.load %arg2[%c0_10, %c0_11] : memref<32x32xf32, #tpu.memory_space<vmem>>, vector<32x32xf32>
    %36 = vector.shape_cast %35 : vector<32x32xf32> to vector<1x32x32xf32>
    %37 = vector.broadcast %36 : vector<1x32x32xf32> to vector<4x32x32xf32>
    %38 = arith.addf %34, %37 : vector<4x32x32xf32>
    %cst_12 = arith.constant dense<0xFF800000> : vector<4x32xf32>
    %39 = vector.multi_reduction <maximumf>, %38, %cst_12 [2] : vector<4x32x32xf32> to vector<4x32xf32>
    %40 = vector.shape_cast %39 : vector<4x32xf32> to vector<4x32x1xf32>
    %41 = vector.broadcast %40 : vector<4x32x1xf32> to vector<4x32x32xf32>
    %42 = arith.subf %38, %41 : vector<4x32x32xf32>
    %43 = math.exp %42 : vector<4x32x32xf32>
    %cst_13 = arith.constant dense<0.000000e+00> : vector<4x32xf32>
    %44 = vector.multi_reduction <add>, %43, %cst_13 [2] : vector<4x32x32xf32> to vector<4x32xf32>
    %45 = vector.shape_cast %44 : vector<4x32xf32> to vector<4x32x1xf32>
    %46 = tpu.reciprocal %45 {approx = true} : vector<4x32x1xf32> -> vector<4x32x1xf32>
    %47 = arith.truncf %43 : vector<4x32x32xf32> to vector<4x32x32xbf16>
    "tpu.trace_start"() <{level = 10 : i32, message = "hqk,hkd->hqd"}> : () -> ()
    %cst_14 = arith.constant dense<0.000000e+00> : vector<4x32x16xf32>
    %48 = tpu.matmul %47, %33, %cst_14 {dimension_numbers = #tpu.dot_dimension_numbers<[2], [1], [1], [2], [0, 0, 0, 1, 1, 2], [0], [0]>} : vector<4x32x32xbf16>, vector<4x32x16xbf16>, vector<4x32x16xf32> -> vector<4x32x16xf32>
    "tpu.trace_stop"() : () -> ()
    %49 = vector.broadcast %46 : vector<4x32x1xf32> to vector<4x32x16xf32>
    %50 = arith.mulf %48, %49 : vector<4x32x16xf32>
    %51 = arith.truncf %50 : vector<4x32x16xf32> to vector<4x32x16xbf16>
    %c0_15 = arith.constant 0 : index
    %c0_16 = arith.constant 0 : index
    %c0_17 = arith.constant 0 : index
    %52 = vector.load %arg4[%c0_15, %c0_16, %c0_17] : memref<4x16x64xbf16, #tpu.memory_space<vmem>>, vector<4x16x64xbf16>
    "tpu.trace_start"() <{level = 10 : i32, message = "hmd,hdn->hmn"}> : () -> ()
    %cst_18 = arith.constant dense<0.000000e+00> : vector<4x32x64xf32>
    %53 = tpu.matmul %51, %52, %cst_18 {dimension_numbers = #tpu.dot_dimension_numbers<[2], [1], [1], [2], [0, 0, 0, 1, 1, 2], [0], [0]>} : vector<4x32x16xbf16>, vector<4x16x64xbf16>, vector<4x32x64xf32> -> vector<4x32x64xf32>
    "tpu.trace_stop"() : () -> ()
    %cst_19 = arith.constant dense<0.000000e+00> : vector<32x64xf32>
    %54 = vector.multi_reduction <add>, %53, %cst_19 [0] : vector<4x32x64xf32> to vector<32x64xf32>
    %55 = arith.addf %0, %54 : vector<32x64xf32>
    %56 = arith.mulf %55, %55 : vector<32x64xf32>
    %cst_20 = arith.constant dense<0.000000e+00> : vector<32xf32>
    %57 = vector.multi_reduction <add>, %56, %cst_20 [1] : vector<32x64xf32> to vector<32xf32>
    %58 = vector.shape_cast %57 : vector<32xf32> to vector<32x1xf32>
    %cst_21 = arith.constant 6.400000e+01 : f32
    %59 = vector.broadcast %cst_21 : f32 to vector<32x1xf32>
    %60 = arith.divf %58, %59 : vector<32x1xf32>
    %cst_22 = arith.constant 9.99999974E-6 : f32
    %61 = vector.broadcast %cst_22 : f32 to vector<32x1xf32>
    %62 = arith.addf %60, %61 : vector<32x1xf32>
    %63 = math.rsqrt %62 : vector<32x1xf32>
    %64 = vector.broadcast %63 : vector<32x1xf32> to vector<32x64xf32>
    %65 = arith.mulf %55, %64 : vector<32x64xf32>
    %66 = arith.truncf %65 : vector<32x64xf32> to vector<32x64xbf16>
    %c0_23 = arith.constant 0 : index
    %c0_24 = arith.constant 0 : index
    %67 = vector.load %arg5[%c0_23, %c0_24] : memref<64x256xbf16, #tpu.memory_space<vmem>>, vector<64x256xbf16>
    %cst_25 = arith.constant dense<0.000000e+00> : vector<32x256xf32>
    %68 = tpu.matmul %66, %67, %cst_25 {dimension_numbers = #tpu.dot_dimension_numbers<[1], [0], [0], [1], [0, 0, 1, 1], [], []>} : vector<32x64xbf16>, vector<64x256xbf16>, vector<32x256xf32> -> vector<32x256xf32>
    %69 = arith.mulf %68, %68 : vector<32x256xf32>
    %70 = arith.mulf %68, %69 : vector<32x256xf32>
    %cst_26 = arith.constant 4.471500e-02 : f32
    %71 = vector.broadcast %cst_26 : f32 to vector<32x256xf32>
    %72 = arith.mulf %71, %70 : vector<32x256xf32>
    %73 = arith.addf %68, %72 : vector<32x256xf32>
    %cst_27 = arith.constant 0.797884583 : f32
    %74 = vector.broadcast %cst_27 : f32 to vector<32x256xf32>
    %75 = arith.mulf %74, %73 : vector<32x256xf32>
    %76 = math.tanh %75 : vector<32x256xf32>
    %cst_28 = arith.constant 1.000000e+00 : f32
    %77 = vector.broadcast %cst_28 : f32 to vector<32x256xf32>
    %78 = arith.addf %77, %76 : vector<32x256xf32>
    %cst_29 = arith.constant 5.000000e-01 : f32
    %79 = vector.broadcast %cst_29 : f32 to vector<32x256xf32>
    %80 = arith.mulf %79, %78 : vector<32x256xf32>
    %81 = arith.mulf %68, %80 : vector<32x256xf32>
    %82 = arith.truncf %81 : vector<32x256xf32> to vector<32x256xbf16>
    %c0_30 = arith.constant 0 : index
    %c0_31 = arith.constant 0 : index
    %83 = vector.load %arg6[%c0_30, %c0_31] : memref<256x64xbf16, #tpu.memory_space<vmem>>, vector<256x64xbf16>
    %cst_32 = arith.constant dense<0.000000e+00> : vector<32x64xf32>
    %84 = tpu.matmul %82, %83, %cst_32 {dimension_numbers = #tpu.dot_dimension_numbers<[1], [0], [0], [1], [0, 0, 1, 1], [], []>} : vector<32x256xbf16>, vector<256x64xbf16>, vector<32x64xf32> -> vector<32x64xf32>
    %85 = arith.addf %55, %84 : vector<32x64xf32>
    %c0_33 = arith.constant 0 : index
    %c0_34 = arith.constant 0 : index
    %86 = vector.load %arg7[%c0_33, %c0_34] : memref<32x64xf32, #tpu.memory_space<vmem>>, vector<32x64xf32>
    tpu.vector_store %arg7[%c0_33, %c0_34], %85 {strides = array<i32>} : memref<32x64xf32, #tpu.memory_space<vmem>>, vector<32x64xf32>,
    return
  }
}

</mosaic_0001>

<llo_original>
// kernel: transformer_block.1
$region0: #{transformer_block.1}
  #allocation0 [shape = 'u32[]', space=smem, size = 0x4, offset = 0x4, fixed_abs, tag = 'smem constant byte address 0x4 - core index']
  #allocation1 [shape = 'u32[144,128]{1,0:T(1,128)}', space=vmem, size = 0x12000, scoped, tag = 'internal scratch']
  %s0 = inlined_call_operand.hbm [shape: f32[32,64], index: 0, kind: input, shape index: {}]
  %s1 = inlined_call_operand.hbm [shape: f32[32,64], index: 1, kind: input, shape index: {}]
  %s2 = inlined_call_operand.hbm [shape: f32[32,32], index: 2, kind: input, shape index: {}]
  %s3 = inlined_call_operand.vmem [shape: bf16[4,64,80], index: 3, kind: input, shape index: {}]
  %s4 = inlined_call_operand.hbm [shape: bf16[4,16,64], index: 4, kind: input, shape index: {}]
  %s5 = inlined_call_operand.vmem [shape: bf16[64,256], index: 5, kind: input, shape index: {}]
  %s6 = inlined_call_operand.vmem [shape: bf16[256,64], index: 6, kind: input, shape index: {}]
  %s7 = inlined_call_operand.hbm [shape: f32[32,64], index: 7, kind: output, shape index: {}]
  %s8 = sld [smem:[#allocation0]]
  $region54: #{transformer_block.1} parent=0
    _
  %s10 = ssub.s32 1, %s8
  %s11 = scalar_select 0, %s10, %s8
  $region1: #{transformer_block.1} parent=0
    #allocation2 [shape = 'u8[16384]{0}', space=vmem, size = 0x4000, scoped, tag = 'input window, operand 0, single buffered']
    #allocation3 [shape = 's32[1]{0}', space=sflag, size = 0x4, scoped, tag = 'scoped memory for transformer_block.1']
    #allocation4 [shape = 's32[1]{0}', space=sflag, size = 0x4, scoped, tag = 'scoped memory for transformer_block.1']
    #allocation5 [shape = 'u8[16384]{0}', space=vmem, size = 0x4000, scoped, tag = 'input window, operand 1, single buffered']
    #allocation6 [shape = 's32[1]{0}', space=sflag, size = 0x4, scoped, tag = 'scoped memory for transformer_block.1']
    #allocation7 [shape = 'u8[16384]{0}', space=vmem, size = 0x4000, scoped, tag = 'input window, operand 2, single buffered']
    #allocation8 [shape = 'u8[16384]{0}', space=vmem, size = 0x4000, scoped, tag = 'input window, operand 4, single buffered']
    #allocation9 [shape = 's32[1]{0}', space=sflag, size = 0x4, scoped, tag = 'scoped memory for transformer_block.1']
    #allocation10 [shape = 'u8[16384]{0}', space=vmem, size = 0x4000, scoped, tag = 'output window, operand 0, single buffered']
    %12 = vsyncpa [#allocation3], 0
    %13 = vsyncpa [#allocation6], 0
    %14 = vsyncpa [#allocation9], 0
    %15 = vsyncpa [#allocation4], 0
    // Predicated region
    $region2: #{transformer_block.1} parent=1 // pred_check
      _
    $region3: #{transformer_block.1} parent=1 // pred_check_branch
      %17 = sbr.rel (0) target = $region5
    $region4: #{transformer_block.1} parent=1 // pred_region
      %s19 = ssub.s32 512, 512
      %20 = vsyncadd [#allocation3], %s19
      %s21 = sshll.u32 [#allocation2], 4
      %s22 = int_to_ptr.vmem [resolvable:$true] %s21
      %27 = dma.hbm_to_vmem [thread:$0]  %s0, 512, %s22, [#allocation3], 128, 128, 8
    $region5: #{transformer_block.1} parent=1 // pred_fallthru
      _
    // Predicated region
    $region6: #{transformer_block.1} parent=1 // pred_check
      _
    $region7: #{transformer_block.1} parent=1 // pred_check_branch
      %29 = sbr.rel (0) target = $region9
    $region8: #{transformer_block.1} parent=1 // pred_region
      %s31 = ssub.s32 512, 512
      %32 = vsyncadd [#allocation6], %s31
      %s33 = sshll.u32 [#allocation5], 4
      %s34 = int_to_ptr.vmem [resolvable:$true] %s33
      %39 = dma.hbm_to_vmem [thread:$0]  %s1, 512, %s34, [#allocation6], 128, 128, 8
    $region9: #{transformer_block.1} parent=1 // pred_fallthru
      _
    // Predicated region
    $region10: #{transformer_block.1} parent=1 // pred_check
      _
    $region11: #{transformer_block.1} parent=1 // pred_check_branch
      %41 = sbr.rel (0) target = $region13
    $region12: #{transformer_block.1} parent=1 // pred_region
      %s43 = ssub.s32 512, 512
      %44 = vsyncadd [#allocation6], %s43
      %s45 = sshll.u32 [#allocation7], 4
      %s46 = int_to_ptr.vmem [resolvable:$true] %s45
      %51 = dma.hbm_to_vmem [thread:$0]  %s2, 512, %s46, [#allocation6], 128, 128, 8
    $region13: #{transformer_block.1} parent=1 // pred_fallthru
      _
    // Predicated region
    $region14: #{transformer_block.1} parent=1 // pred_check
      _
    $region15: #{transformer_block.1} parent=1 // pred_check_branch
      %53 = sbr.rel (0) target = $region17
    $region16: #{transformer_block.1} parent=1 // pred_region
      _
    $region17: #{transformer_block.1} parent=1 // pred_fallthru
      _
    // Predicated region
    $region18: #{transformer_block.1} parent=1 // pred_check
      _
    $region19: #{transformer_block.1} parent=1 // pred_check_branch
      %55 = sbr.rel (0) target = $region21
    $region20: #{transformer_block.1} parent=1 // pred_region
      %s57 = ssub.s32 512, 512
      %58 = vsyncadd [#allocation9], %s57
      %s59 = sshll.u32 [#allocation8], 4
      %s60 = int_to_ptr.vmem [resolvable:$true] %s59
      %65 = dma.hbm_to_vmem [thread:$0]  %s4, 512, %s60, [#allocation9], 64, 64, 4
    $region21: #{transformer_block.1} parent=1 // pred_fallthru
      _
    // Predicated region
    $region22: #{transformer_block.1} parent=1 // pred_check
      _
    $region23: #{transformer_block.1} parent=1 // pred_check_branch
      %67 = sbr.rel (0) target = $region25
    $region24: #{transformer_block.1} parent=1 // pred_region
      _
    $region25: #{transformer_block.1} parent=1 // pred_fallthru
      _
    // Predicated region
    $region26: #{transformer_block.1} parent=1 // pred_check
      _
    $region27: #{transformer_block.1} parent=1 // pred_check_branch
      %69 = sbr.rel (0) target = $region29
    $region28: #{transformer_block.1} parent=1 // pred_region
      _
    $region29: #{transformer_block.1} parent=1 // pred_fallthru
      _
    // Predicated region
    $region30: #{transformer_block.1} parent=1 // pred_check
      _
    $region31: #{transformer_block.1} parent=1 // pred_check_branch
      %71 = sbr.rel (0) target = $region33
    $region32: #{transformer_block.1} parent=1 // pred_region
      %72 = dma.done [#allocation3], 512
    $region33: #{transformer_block.1} parent=1 // pred_fallthru
      _
    // Predicated region
    $region34: #{transformer_block.1} parent=1 // pred_check
      _
    $region35: #{transformer_block.1} parent=1 // pred_check_branch
      %74 = sbr.rel (0) target = $region37
    $region36: #{transformer_block.1} parent=1 // pred_region
      %75 = dma.done [#allocation6], 512
    $region37: #{transformer_block.1} parent=1 // pred_fallthru
      _
    // Predicated region
    $region38: #{transformer_block.1} parent=1 // pred_check
      _
    $region39: #{transformer_block.1} parent=1 // pred_check_branch
      %77 = sbr.rel (0) target = $region41
    $region40: #{transformer_block.1} parent=1 // pred_region
      %78 = dma.done [#allocation6], 512
    $region41: #{transformer_block.1} parent=1 // pred_fallthru
      _
    // Predicated region
    $region42: #{transformer_block.1} parent=1 // pred_check
      _
    $region43: #{transformer_block.1} parent=1 // pred_check_branch
      %80 = sbr.rel (0) target = $region45
    $region44: #{transformer_block.1} parent=1 // pred_region
      %81 = dma.done [#allocation9], 512
    $region45: #{transformer_block.1} parent=1 // pred_fallthru
      _
    %v83 = vld [vmem:[#allocation2] sm:$0xff]
    %v84 = vld [vmem:[#allocation2 + $0x8] sm:$0xff]
    %v85 = vld [vmem:[#allocation2 + $0x10] sm:$0xff]
    %v86 = vld [vmem:[#allocation2 + $0x18] sm:$0xff]
    %v87 = vmul.f32 %v83, %v83
    %v88 = vmul.f32 %v84, %v84
    %v89 = vmul.f32 %v85, %v85
    %v90 = vmul.f32 %v86, %v86
    %vm91 = vcmask 523264
    %v92 = vsel %vm91, %v87, 0.0
    %93 = vadd.xlane.f32.xlu0 %v92
    %v94 = vpop.xlane.xlu0 %93
    %v95 = vsel %vm91, %v88, 0.0
    %96 = vadd.xlane.f32.xlu0 %v95
    %v97 = vpop.xlane.xlu0 %96
    %v98 = vsel %vm91, %v89, 0.0
    %99 = vadd.xlane.f32.xlu0 %v98
    %v100 = vpop.xlane.xlu0 %99
    %v101 = vsel %vm91, %v90, 0.0
    %102 = vadd.xlane.f32.xlu0 %v101
    %v103 = vpop.xlane.xlu0 %102
    %v104 = vrcp.pop 64.0
    %v105 = vmul.f32 %v94, %v104
    %v106 = vmul.f32 %v97, %v104
    %v107 = vmul.f32 %v100, %v104
    %v108 = vmul.f32 %v103, %v104
    %v109 = vadd.f32 %v105, 1e-05
    %v110 = vadd.f32 %v106, 1e-05
    %v111 = vadd.f32 %v107, 1e-05
    %v112 = vadd.f32 %v108, 1e-05
    %v113 = vrsqrt.pop %v109
    %v114 = vrsqrt.pop %v110
    %v115 = vrsqrt.pop %v111
    %v116 = vrsqrt.pop %v112
    %v117 = vmul.f32 %v83, %v113
    %v118 = vmul.f32 %v84, %v114
    %v119 = vmul.f32 %v85, %v115
    %v120 = vmul.f32 %v86, %v116
    %v121 = vpack.c.bf16 %v118, %v117
    %v122 = vpack.c.bf16 %v120, %v119
    %v123 = vld [vmem:[%s3] sm:$0xf]
    %v124 = vld [vmem:[%s3 + $0x4] sm:$0xf]
    %v125 = vld [vmem:[%s3 + $0x8] sm:$0xf]
    %v126 = vld [vmem:[%s3 + $0xc] sm:$0xf]
    %v127 = vld [vmem:[%s3 + $0x10] sm:$0xf]
    %v128 = vld [vmem:[%s3 + $0x14] sm:$0xf]
    %v129 = vld [vmem:[%s3 + $0x18] sm:$0xf]
    %v130 = vld [vmem:[%s3 + $0x1c] sm:$0xf]
    %v131 = vld [vmem:[%s3 + $0x20] sm:$0xf]
    %v132 = vld [vmem:[%s3 + $0x24] sm:$0xf]
    %v133 = vld [vmem:[%s3 + $0x28] sm:$0xf]
    %v134 = vld [vmem:[%s3 + $0x2c] sm:$0xf]
    %v135 = vld [vmem:[%s3 + $0x30] sm:$0xf]
    %v136 = vld [vmem:[%s3 + $0x34] sm:$0xf]
    %v137 = vld [vmem:[%s3 + $0x38] sm:$0xf]
    %v138 = vld [vmem:[%s3 + $0x3c] sm:$0xf]
    %v139 = vld [vmem:[%s3 + $0x40] sm:$0xf]
    %v140 = vld [vmem:[%s3 + $0x44] sm:$0xf]
    %v141 = vld [vmem:[%s3 + $0x48] sm:$0xf]
    %v142 = vld [vmem:[%s3 + $0x4c] sm:$0xf]
    %v143 = vld [vmem:[%s3 + $0x50] sm:$0xf]
    %v144 = vld [vmem:[%s3 + $0x54] sm:$0xf]
    %v145 = vld [vmem:[%s3 + $0x58] sm:$0xf]
    %v146 = vld [vmem:[%s3 + $0x5c] sm:$0xf]
    %v147 = vld [vmem:[%s3 + $0x60] sm:$0xf]
    %v148 = vld [vmem:[%s3 + $0x64] sm:$0xf]
    %v149 = vld [vmem:[%s3 + $0x68] sm:$0xf]
    %v150 = vld [vmem:[%s3 + $0x6c] sm:$0xf]
    %v151 = vld [vmem:[%s3 + $0x70] sm:$0xf]
    %v152 = vld [vmem:[%s3 + $0x74] sm:$0xf]
    %v153 = vld [vmem:[%s3 + $0x78] sm:$0xf]
    %v154 = vld [vmem:[%s3 + $0x7c] sm:$0xf]
    %v163 = vunpack.c.l.b16 %v123
    %v164 = vunpack.c.l.b16 %v124
    %v165 = vunpack.c.l.b16 %v125
    %v166 = vunpack.c.l.b16 %v126
    %v167 = vunpack.c.l.b16 %v127
    %v168 = vunpack.c.l.b16 %v128
    %v169 = vunpack.c.l.b16 %v129
    %v170 = vunpack.c.l.b16 %v130
    %v171 = vpack.c.b16 %v164, %v163
    %v172 = vpack.c.b16 %v166, %v165
    %v173 = vpack.c.b16 %v168, %v167
    %v174 = vpack.c.b16 %v170, %v169
    %v180 = vsel %vm91, %v121, 0
    %v183 = vsel %vm91, %v122, 0
    %185 = vmatprep.subr.bf16.mxu0 0
    %186 = vmatpush1.bf16.msra.mxu0 0
    %187 = vmatprep.subr.bf16.mxu0 0
    %188 = vmatpush1.bf16.msra.mxu0 0
    %189 = vmatprep.subr.bf16.mxu0 0
    %190 = vmatpush1.bf16.msra.mxu0 0
    %191 = vmatprep.subr.bf16.mxu0 0
    %192 = vmatpush1.bf16.msra.mxu0 0
    %193 = vmatprep.subr.bf16.mxu0 0
    %194 = vmatpush1.bf16.msra.mxu0 %v174
    %195 = vmatprep.subr.bf16.mxu0 0
    %196 = vmatpush1.bf16.msra.mxu0 %v173
    %197 = vmatprep.subr.bf16.mxu0 0
    %198 = vmatpush1.bf16.msra.mxu0 %v172
    %199 = vmatprep.subr.bf16.mxu0 0
    %200 = vmatpush1.bf16.msra.mxu0 %v171
    %201 = vmatprep.subr.bf16.mxu0 0
    %202 = vmatpush2.bf16.msra.mxu0 0
    %203 = vmatprep.subr.bf16.mxu0 0
    %204 = vmatpush2.bf16.msra.mxu0 0
    %205 = vmatprep.subr.bf16.mxu0 0
    %206 = vmatpush2.bf16.msra.mxu0 0
    %207 = vmatprep.subr.bf16.mxu0 0
    %208 = vmatpush2.bf16.msra.mxu0 0
    %209 = vmatprep.subr.bf16.mxu0 0
    %210 = vmatpush2.bf16.msra.mxu0 0
    %211 = vmatprep.subr.bf16.mxu0 0
    %212 = vmatpush2.bf16.msra.mxu0 0
    %213 = vmatprep.subr.bf16.mxu0 0
    %214 = vmatpush2.bf16.msra.mxu0 0
    %215 = vmatprep.subr.bf16.mxu0 0
    %216 = vmatpush2.bf16.msra.mxu0 0
    %217 = vmatprep.mubr.bf16.mxu0 0
    %218 = vmatmul.mubr.bf16.gmra.mxu0 %v180
    %v219 = vpop.f32.mrf.mxu0
    %v220 = vadd.f32 0.0, %v219
    %v221 = vpop.f32.mrf.mxu0
    %v222 = vpop.f32.mrf.mxu0
    %v223 = vadd.f32 0.0, %v222
    %v224 = vpop.f32.mrf.mxu0
    %225 = vmatprep.mubr.bf16.mxu0 0
    %226 = vmatmul.mubr.bf16.gmra.mxu0 %v183
    %v227 = vpop.f32.mrf.mxu0
    %v228 = vadd.f32 0.0, %v227
    %v229 = vpop.f32.mrf.mxu0
    %v230 = vpop.f32.mrf.mxu0
    %v231 = vadd.f32 0.0, %v230
    %v232 = vpop.f32.mrf.mxu0
    %233 = vdwg.mxu0
    %v242 = vunpack.c.l.b16 %v131
    %v243 = vunpack.c.l.b16 %v132
    %v244 = vunpack.c.l.b16 %v133
    %v245 = vunpack.c.l.b16 %v134
    %v246 = vunpack.c.l.b16 %v135
    %v247 = vunpack.c.l.b16 %v136
    %v248 = vunpack.c.l.b16 %v137
    %v249 = vunpack.c.l.b16 %v138
    %v250 = vpack.c.b16 %v243, %v242
    %v251 = vpack.c.b16 %v245, %v244
    %v252 = vpack.c.b16 %v247, %v246
    %v253 = vpack.c.b16 %v249, %v248
    %258 = vmatprep.subr.bf16.mxu0 0
    %259 = vmatpush1.bf16.msra.mxu0 0
    %260 = vmatprep.subr.bf16.mxu0 0
    %261 = vmatpush1.bf16.msra.mxu0 0
    %262 = vmatprep.subr.bf16.mxu0 0
    %263 = vmatpush1.bf16.msra.mxu0 0
    %264 = vmatprep.subr.bf16.mxu0 0
    %265 = vmatpush1.bf16.msra.mxu0 0
    %266 = vmatprep.subr.bf16.mxu0 0
    %267 = vmatpush1.bf16.msra.mxu0 %v253
    %268 = vmatprep.subr.bf16.mxu0 0
    %269 = vmatpush1.bf16.msra.mxu0 %v252
    %270 = vmatprep.subr.bf16.mxu0 0
    %271 = vmatpush1.bf16.msra.mxu0 %v251
    %272 = vmatprep.subr.bf16.mxu0 0
    %273 = vmatpush1.bf16.msra.mxu0 %v250
    %274 = vmatprep.subr.bf16.mxu0 0
    %275 = vmatpush2.bf16.msra.mxu0 0
    %276 = vmatprep.subr.bf16.mxu0 0
    %277 = vmatpush2.bf16.msra.mxu0 0
    %278 = vmatprep.subr.bf16.mxu0 0
    %279 = vmatpush2.bf16.msra.mxu0 0
    %280 = vmatprep.subr.bf16.mxu0 0
    %281 = vmatpush2.bf16.msra.mxu0 0
    %282 = vmatprep.subr.bf16.mxu0 0
    %283 = vmatpush2.bf16.msra.mxu0 0
    %284 = vmatprep.subr.bf16.mxu0 0
    %285 = vmatpush2.bf16.msra.mxu0 0
    %286 = vmatprep.subr.bf16.mxu0 0
    %287 = vmatpush2.bf16.msra.mxu0 0
    %288 = vmatprep.subr.bf16.mxu0 0
    %289 = vmatpush2.bf16.msra.mxu0 0
    %290 = vmatprep.mubr.bf16.mxu0 0
    %291 = vmatmul.mubr.bf16.gmra.mxu0 %v180
    %v292 = vpop.f32.mrf.mxu0
    %v293 = vadd.f32 0.0, %v292
    %v294 = vpop.f32.mrf.mxu0
    %v295 = vpop.f32.mrf.mxu0
    %v296 = vadd.f32 0.0, %v295
    %v297 = vpop.f32.mrf.mxu0
    %298 = vmatprep.mubr.bf16.mxu0 0
    %299 = vmatmul.mubr.bf16.gmra.mxu0 %v183
    %v300 = vpop.f32.mrf.mxu0
    %v301 = vadd.f32 0.0, %v300
    %v302 = vpop.f32.mrf.mxu0
    %v303 = vpop.f32.mrf.mxu0
    %v304 = vadd.f32 0.0, %v303
    %v305 = vpop.f32.mrf.mxu0
    %306 = vdwg.mxu0
    %v315 = vunpack.c.l.b16 %v139
    %v316 = vunpack.c.l.b16 %v140
    %v317 = vunpack.c.l.b16 %v141
    %v318 = vunpack.c.l.b16 %v142
    %v319 = vunpack.c.l.b16 %v143
    %v320 = vunpack.c.l.b16 %v144
    %v321 = vunpack.c.l.b16 %v145
    %v322 = vunpack.c.l.b16 %v146
    %v323 = vpack.c.b16 %v316, %v315
    %v324 = vpack.c.b16 %v318, %v317
    %v325 = vpack.c.b16 %v320, %v319
    %v326 = vpack.c.b16 %v322, %v321
    %331 = vmatprep.subr.bf16.mxu0 0
    %332 = vmatpush1.bf16.msra.mxu0 0
    %333 = vmatprep.subr.bf16.mxu0 0
    %334 = vmatpush1.bf16.msra.mxu0 0
    %335 = vmatprep.subr.bf16.mxu0 0
    %336 = vmatpush1.bf16.msra.mxu0 0
    %337 = vmatprep.subr.bf16.mxu0 0
    %338 = vmatpush1.bf16.msra.mxu0 0
    %339 = vmatprep.subr.bf16.mxu0 0
    %340 = vmatpush1.bf16.msra.mxu0 %v326
    %341 = vmatprep.subr.bf16.mxu0 0
    %342 = vmatpush1.bf16.msra.mxu0 %v325
    %343 = vmatprep.subr.bf16.mxu0 0
    %344 = vmatpush1.bf16.msra.mxu0 %v324
    %345 = vmatprep.subr.bf16.mxu0 0
    %346 = vmatpush1.bf16.msra.mxu0 %v323
    %347 = vmatprep.subr.bf16.mxu0 0
    %348 = vmatpush2.bf16.msra.mxu0 0
    %349 = vmatprep.subr.bf16.mxu0 0
    %350 = vmatpush2.bf16.msra.mxu0 0
    %351 = vmatprep.subr.bf16.mxu0 0
    %352 = vmatpush2.bf16.msra.mxu0 0
    %353 = vmatprep.subr.bf16.mxu0 0
    %354 = vmatpush2.bf16.msra.mxu0 0
    %355 = vmatprep.subr.bf16.mxu0 0
    %356 = vmatpush2.bf16.msra.mxu0 0
    %357 = vmatprep.subr.bf16.mxu0 0
    %358 = vmatpush2.bf16.msra.mxu0 0
    %359 = vmatprep.subr.bf16.mxu0 0
    %360 = vmatpush2.bf16.msra.mxu0 0
    %361 = vmatprep.subr.bf16.mxu0 0
    %362 = vmatpush2.bf16.msra.mxu0 0
    %363 = vmatprep.mubr.bf16.mxu0 0
    %364 = vmatmul.mubr.bf16.gmra.mxu0 %v180
    %v365 = vpop.f32.mrf.mxu0
    %v366 = vadd.f32 0.0, %v365
    %v367 = vpop.f32.mrf.mxu0
    %v368 = vpop.f32.mrf.mxu0
    %v369 = vadd.f32 0.0, %v368
    %v370 = vpop.f32.mrf.mxu0
    %371 = vmatprep.mubr.bf16.mxu0 0
    %372 = vmatmul.mubr.bf16.gmra.mxu0 %v183
    %v373 = vpop.f32.mrf.mxu0
    %v374 = vadd.f32 0.0, %v373
    %v375 = vpop.f32.mrf.mxu0
    %v376 = vpop.f32.mrf.mxu0
    %v377 = vadd.f32 0.0, %v376
    %v378 = vpop.f32.mrf.mxu0
    %379 = vdwg.mxu0
    %v388 = vunpack.c.l.b16 %v147
    %v389 = vunpack.c.l.b16 %v148
    %v390 = vunpack.c.l.b16 %v149
    %v391 = vunpack.c.l.b16 %v150
    %v392 = vunpack.c.l.b16 %v151
    %v393 = vunpack.c.l.b16 %v152
    %v394 = vunpack.c.l.b16 %v153
    %v395 = vunpack.c.l.b16 %v154
    %v396 = vpack.c.b16 %v389, %v388
    %v397 = vpack.c.b16 %v391, %v390
    %v398 = vpack.c.b16 %v393, %v392
    %v399 = vpack.c.b16 %v395, %v394
    %404 = vmatprep.subr.bf16.mxu0 0
    %405 = vmatpush1.bf16.msra.mxu0 0
    %406 = vmatprep.subr.bf16.mxu0 0
    %407 = vmatpush1.bf16.msra.mxu0 0
    %408 = vmatprep.subr.bf16.mxu0 0
    %409 = vmatpush1.bf16.msra.mxu0 0
    %410 = vmatprep.subr.bf16.mxu0 0
    %411 = vmatpush1.bf16.msra.mxu0 0
    %412 = vmatprep.subr.bf16.mxu0 0
    %413 = vmatpush1.bf16.msra.mxu0 %v399
    %414 = vmatprep.subr.bf16.mxu0 0
    %415 = vmatpush1.bf16.msra.mxu0 %v398
    %416 = vmatprep.subr.bf16.mxu0 0
    %417 = vmatpush1.bf16.msra.mxu0 %v397
    %418 = vmatprep.subr.bf16.mxu0 0
    %419 = vmatpush1.bf16.msra.mxu0 %v396
    %420 = vmatprep.subr.bf16.mxu0 0
    %421 = vmatpush2.bf16.msra.mxu0 0
    %422 = vmatprep.subr.bf16.mxu0 0
    %423 = vmatpush2.bf16.msra.mxu0 0
    %424 = vmatprep.subr.bf16.mxu0 0
    %425 = vmatpush2.bf16.msra.mxu0 0
    %426 = vmatprep.subr.bf16.mxu0 0
    %427 = vmatpush2.bf16.msra.mxu0 0
    %428 = vmatprep.subr.bf16.mxu0 0
    %429 = vmatpush2.bf16.msra.mxu0 0
    %430 = vmatprep.subr.bf16.mxu0 0
    %431 = vmatpush2.bf16.msra.mxu0 0
    %432 = vmatprep.subr.bf16.mxu0 0
    %433 = vmatpush2.bf16.msra.mxu0 0
    %434 = vmatprep.subr.bf16.mxu0 0
    %435 = vmatpush2.bf16.msra.mxu0 0
    %436 = vmatprep.mubr.bf16.mxu0 0
    %437 = vmatmul.mubr.bf16.gmra.mxu0 %v180
    %v438 = vpop.f32.mrf.mxu0
    %v439 = vadd.f32 0.0, %v438
    %v440 = vpop.f32.mrf.mxu0
    %v441 = vpop.f32.mrf.mxu0
    %v442 = vadd.f32 0.0, %v441
    %v443 = vpop.f32.mrf.mxu0
    %444 = vmatprep.mubr.bf16.mxu0 0
    %445 = vmatmul.mubr.bf16.gmra.mxu0 %v183
    %v446 = vpop.f32.mrf.mxu0
    %v447 = vadd.f32 0.0, %v446
    %v448 = vpop.f32.mrf.mxu0
    %v449 = vpop.f32.mrf.mxu0
    %v450 = vadd.f32 0.0, %v449
    %v451 = vpop.f32.mrf.mxu0
    %452 = vdwg.mxu0
    %v453 = vld [vmem:[#allocation5] sm:$0xff]
    %v454 = vld [vmem:[#allocation5 + $0x8] sm:$0xff]
    %v455 = vld [vmem:[#allocation5 + $0x10] sm:$0xff]
    %v456 = vld [vmem:[#allocation5 + $0x18] sm:$0xff]
    %v457 = vmul.f32 %v220, %v453
    %v458 = vmul.f32 %v223, %v454
    %v459 = vmul.f32 %v228, %v455
    %v460 = vmul.f32 %v231, %v456
    %v461 = vmul.f32 %v293, %v453
    %v462 = vmul.f32 %v296, %v454
    %v463 = vmul.f32 %v301, %v455
    %v464 = vmul.f32 %v304, %v456
    %v465 = vmul.f32 %v366, %v453
    %v466 = vmul.f32 %v369, %v454
    %v467 = vmul.f32 %v374, %v455
    %v468 = vmul.f32 %v377, %v456
    %v469 = vmul.f32 %v439, %v453
    %v470 = vmul.f32 %v442, %v454
    %v471 = vmul.f32 %v447, %v455
    %v472 = vmul.f32 %v450, %v456
    %489 = vrot.lane.b32.xlu0 %v457, 96
    %v490 = vpop.permute.xlu0 %489
    %491 = vrot.lane.b32.xlu0 %v458, 96
    %v492 = vpop.permute.xlu0 %491
    %493 = vrot.lane.b32.xlu0 %v459, 96
    %v494 = vpop.permute.xlu0 %493
    %495 = vrot.lane.b32.xlu0 %v460, 96
    %v496 = vpop.permute.xlu0 %495
    %497 = vrot.lane.b32.xlu0 %v461, 96
    %v498 = vpop.permute.xlu0 %497
    %499 = vrot.lane.b32.xlu0 %v462, 96
    %v500 = vpop.permute.xlu0 %499
    %501 = vrot.lane.b32.xlu0 %v463, 96
    %v502 = vpop.permute.xlu0 %501
    %503 = vrot.lane.b32.xlu0 %v464, 96
    %v504 = vpop.permute.xlu0 %503
    %505 = vrot.lane.b32.xlu0 %v465, 96
    %v506 = vpop.permute.xlu0 %505
    %507 = vrot.lane.b32.xlu0 %v466, 96
    %v508 = vpop.permute.xlu0 %507
    %509 = vrot.lane.b32.xlu0 %v467, 96
    %v510 = vpop.permute.xlu0 %509
    %511 = vrot.lane.b32.xlu0 %v468, 96
    %v512 = vpop.permute.xlu0 %511
    %513 = vrot.lane.b32.xlu0 %v469, 96
    %v514 = vpop.permute.xlu0 %513
    %515 = vrot.lane.b32.xlu0 %v470, 96
    %v516 = vpop.permute.xlu0 %515
    %517 = vrot.lane.b32.xlu0 %v471, 96
    %v518 = vpop.permute.xlu0 %517
    %519 = vrot.lane.b32.xlu0 %v472, 96
    %v520 = vpop.permute.xlu0 %519
    %v537 = vadd.f32 %v457, %v490
    %v538 = vadd.f32 %v458, %v492
    %v539 = vadd.f32 %v459, %v494
    %v540 = vadd.f32 %v460, %v496
    %v541 = vadd.f32 %v461, %v498
    %v542 = vadd.f32 %v462, %v500
    %v543 = vadd.f32 %v463, %v502
    %v544 = vadd.f32 %v464, %v504
    %v545 = vadd.f32 %v465, %v506
    %v546 = vadd.f32 %v466, %v508
    %v547 = vadd.f32 %v467, %v510
    %v548 = vadd.f32 %v468, %v512
    %v549 = vadd.f32 %v469, %v514
    %v550 = vadd.f32 %v470, %v516
    %v551 = vadd.f32 %v471, %v518
    %v552 = vadd.f32 %v472, %v520
    %v553 = vpack.c.bf16 %v538, %v537
    %v554 = vpack.c.bf16 %v540, %v539
    %v555 = vpack.c.bf16 %v542, %v541
    %v556 = vpack.c.bf16 %v544, %v543
    %v557 = vpack.c.bf16 %v546, %v545
    %v558 = vpack.c.bf16 %v548, %v547
    %v559 = vpack.c.bf16 %v550, %v549
    %v560 = vpack.c.bf16 %v552, %v551
    %v561 = vpack.c.bf16 %v223, %v220
    %v562 = vpack.c.bf16 %v231, %v228
    %v563 = vpack.c.bf16 %v296, %v293
    %v564 = vpack.c.bf16 %v304, %v301
    %v565 = vpack.c.bf16 %v369, %v366
    %v566 = vpack.c.bf16 %v377, %v374
    %v567 = vpack.c.bf16 %v442, %v439
    %v568 = vpack.c.bf16 %v450, %v447
    %v569 = vld [vmem:[#allocation7] sm:$0xff]
    %v570 = vld [vmem:[#allocation7 + $0x8] sm:$0xff]
    %v571 = vld [vmem:[#allocation7 + $0x10] sm:$0xff]
    %v572 = vld [vmem:[#allocation7 + $0x18] sm:$0xff]
    %575 = vrot.lane.b32.xlu0 %v553, 112
    %v576 = vpop.permute.xlu0 %575
    %577 = vrot.lane.b32.xlu0 %v554, 112
    %v578 = vpop.permute.xlu0 %577
    %vm579 = vcmask 130048
    %v581 = vsel %vm579, %v553, 0
    %v584 = vsel %vm579, %v554, 0
    %v587 = vsel %vm579, %v576, 0
    %v590 = vsel %vm579, %v578, 0
    %592 = vmatprep.subr.bf16.mxu0 0
    %593 = vmatpush1.bf16.xpose.msra.mxu0 0
    %594 = vmatprep.subr.bf16.mxu0 0
    %595 = vmatpush1.bf16.xpose.msra.mxu0 0
    %596 = vmatprep.subr.bf16.mxu0 0
    %597 = vmatpush1.bf16.xpose.msra.mxu0 0
    %598 = vmatprep.subr.bf16.mxu0 0
    %599 = vmatpush1.bf16.xpose.msra.mxu0 0
    %600 = vmatprep.subr.bf16.mxu0 0
    %601 = vmatpush1.bf16.xpose.msra.mxu0 0
    %602 = vmatprep.subr.bf16.mxu0 0
    %603 = vmatpush1.bf16.xpose.msra.mxu0 0
    %604 = vmatprep.subr.bf16.mxu0 0
    %605 = vmatpush1.bf16.xpose.msra.mxu0 %v590
    %606 = vmatprep.subr.bf16.mxu0 0
    %607 = vmatpush1.bf16.xpose.msra.mxu0 %v587
    %608 = vmatprep.subr.bf16.mxu0 0
    %609 = vmatpush2.bf16.xpose.msra.mxu0 0
    %610 = vmatprep.subr.bf16.mxu0 0
    %611 = vmatpush2.bf16.xpose.msra.mxu0 0
    %612 = vmatprep.subr.bf16.mxu0 0
    %613 = vmatpush2.bf16.xpose.msra.mxu0 0
    %614 = vmatprep.subr.bf16.mxu0 0
    %615 = vmatpush2.bf16.xpose.msra.mxu0 0
    %616 = vmatprep.subr.bf16.mxu0 0
    %617 = vmatpush2.bf16.xpose.msra.mxu0 0
    %618 = vmatprep.subr.bf16.mxu0 0
    %619 = vmatpush2.bf16.xpose.msra.mxu0 0
    %620 = vmatprep.subr.bf16.mxu0 0
    %621 = vmatpush2.bf16.xpose.msra.mxu0 0
    %622 = vmatprep.subr.bf16.mxu0 0
    %623 = vmatpush2.bf16.xpose.msra.mxu0 0
    %624 = vmatprep.mubr.bf16.mxu0 0
    %625 = vmatmul.mubr.bf16.gmra.mxu0 %v581
    %v626 = vpop.f32.mrf.mxu0
    %v627 = vadd.f32 %v569, %v626
    %v628 = vpop.f32.mrf.mxu0
    %v629 = vpop.f32.mrf.mxu0
    %v630 = vadd.f32 %v570, %v629
    %v631 = vpop.f32.mrf.mxu0
    %632 = vmatprep.mubr.bf16.mxu0 0
    %633 = vmatmul.mubr.bf16.gmra.mxu0 %v584
    %v634 = vpop.f32.mrf.mxu0
    %v635 = vadd.f32 %v571, %v634
    %v636 = vpop.f32.mrf.mxu0
    %v637 = vpop.f32.mrf.mxu0
    %v638 = vadd.f32 %v572, %v637
    %v639 = vpop.f32.mrf.mxu0
    %640 = vdwg.mxu0
    %643 = vrot.lane.b32.xlu0 %v555, 112
    %v644 = vpop.permute.xlu0 %643
    %645 = vrot.lane.b32.xlu0 %v556, 112
    %v646 = vpop.permute.xlu0 %645
    %v648 = vsel %vm579, %v555, 0
    %v651 = vsel %vm579, %v556, 0
    %v654 = vsel %vm579, %v644, 0
    %v657 = vsel %vm579, %v646, 0
    %659 = vmatprep.subr.bf16.mxu0 0
    %660 = vmatpush1.bf16.xpose.msra.mxu0 0
    %661 = vmatprep.subr.bf16.mxu0 0
    %662 = vmatpush1.bf16.xpose.msra.mxu0 0
    %663 = vmatprep.subr.bf16.mxu0 0
    %664 = vmatpush1.bf16.xpose.msra.mxu0 0
    %665 = vmatprep.subr.bf16.mxu0 0
    %666 = vmatpush1.bf16.xpose.msra.mxu0 0
    %667 = vmatprep.subr.bf16.mxu0 0
    %668 = vmatpush1.bf16.xpose.msra.mxu0 0
    %669 = vmatprep.subr.bf16.mxu0 0
    %670 = vmatpush1.bf16.xpose.msra.mxu0 0
    %671 = vmatprep.subr.bf16.mxu0 0
    %672 = vmatpush1.bf16.xpose.msra.mxu0 %v657
    %673 = vmatprep.subr.bf16.mxu0 0
    %674 = vmatpush1.bf16.xpose.msra.mxu0 %v654
    %675 = vmatprep.subr.bf16.mxu0 0
    %676 = vmatpush2.bf16.xpose.msra.mxu0 0
    %677 = vmatprep.subr.bf16.mxu0 0
    %678 = vmatpush2.bf16.xpose.msra.mxu0 0
    %679 = vmatprep.subr.bf16.mxu0 0
    %680 = vmatpush2.bf16.xpose.msra.mxu0 0
    %681 = vmatprep.subr.bf16.mxu0 0
    %682 = vmatpush2.bf16.xpose.msra.mxu0 0
    %683 = vmatprep.subr.bf16.mxu0 0
    %684 = vmatpush2.bf16.xpose.msra.mxu0 0
    %685 = vmatprep.subr.bf16.mxu0 0
    %686 = vmatpush2.bf16.xpose.msra.mxu0 0
    %687 = vmatprep.subr.bf16.mxu0 0
    %688 = vmatpush2.bf16.xpose.msra.mxu0 0
    %689 = vmatprep.subr.bf16.mxu0 0
    %690 = vmatpush2.bf16.xpose.msra.mxu0 0
    %691 = vmatprep.mubr.bf16.mxu0 0
    %692 = vmatmul.mubr.bf16.gmra.mxu0 %v648
    %v693 = vpop.f32.mrf.mxu0
    %v694 = vadd.f32 %v569, %v693
    %v695 = vpop.f32.mrf.mxu0
    %v696 = vpop.f32.mrf.mxu0
    %v697 = vadd.f32 %v570, %v696
    %v698 = vpop.f32.mrf.mxu0
    %699 = vmatprep.mubr.bf16.mxu0 0
    %700 = vmatmul.mubr.bf16.gmra.mxu0 %v651
    %v701 = vpop.f32.mrf.mxu0
    %v702 = vadd.f32 %v571, %v701
    %v703 = vpop.f32.mrf.mxu0
    %v704 = vpop.f32.mrf.mxu0
    %v705 = vadd.f32 %v572, %v704
    %v706 = vpop.f32.mrf.mxu0
    %707 = vdwg.mxu0
    %710 = vrot.lane.b32.xlu0 %v557, 112
    %v711 = vpop.permute.xlu0 %710
    %712 = vrot.lane.b32.xlu0 %v558, 112
    %v713 = vpop.permute.xlu0 %712
    %v715 = vsel %vm579, %v557, 0
    %v718 = vsel %vm579, %v558, 0
    %v721 = vsel %vm579, %v711, 0
    %v724 = vsel %vm579, %v713, 0
    %726 = vmatprep.subr.bf16.mxu0 0
    %727 = vmatpush1.bf16.xpose.msra.mxu0 0
    %728 = vmatprep.subr.bf16.mxu0 0
    %729 = vmatpush1.bf16.xpose.msra.mxu0 0
    %730 = vmatprep.subr.bf16.mxu0 0
    %731 = vmatpush1.bf16.xpose.msra.mxu0 0
    %732 = vmatprep.subr.bf16.mxu0 0
    %733 = vmatpush1.bf16.xpose.msra.mxu0 0
    %734 = vmatprep.subr.bf16.mxu0 0
    %735 = vmatpush1.bf16.xpose.msra.mxu0 0
    %736 = vmatprep.subr.bf16.mxu0 0
    %737 = vmatpush1.bf16.xpose.msra.mxu0 0
    %738 = vmatprep.subr.bf16.mxu0 0
    %739 = vmatpush1.bf16.xpose.msra.mxu0 %v724
    %740 = vmatprep.subr.bf16.mxu0 0
    %741 = vmatpush1.bf16.xpose.msra.mxu0 %v721
    %742 = vmatprep.subr.bf16.mxu0 0
    %743 = vmatpush2.bf16.xpose.msra.mxu0 0
    %744 = vmatprep.subr.bf16.mxu0 0
    %745 = vmatpush2.bf16.xpose.msra.mxu0 0
    %746 = vmatprep.subr.bf16.mxu0 0
    %747 = vmatpush2.bf16.xpose.msra.mxu0 0
    %748 = vmatprep.subr.bf16.mxu0 0
    %749 = vmatpush2.bf16.xpose.msra.mxu0 0
    %750 = vmatprep.subr.bf16.mxu0 0
    %751 = vmatpush2.bf16.xpose.msra.mxu0 0
    %752 = vmatprep.subr.bf16.mxu0 0
    %753 = vmatpush2.bf16.xpose.msra.mxu0 0
    %754 = vmatprep.subr.bf16.mxu0 0
    %755 = vmatpush2.bf16.xpose.msra.mxu0 0
    %756 = vmatprep.subr.bf16.mxu0 0
    %757 = vmatpush2.bf16.xpose.msra.mxu0 0
    %758 = vmatprep.mubr.bf16.mxu0 0
    %759 = vmatmul.mubr.bf16.gmra.mxu0 %v715
    %v760 = vpop.f32.mrf.mxu0
    %v761 = vadd.f32 %v569, %v760
    %v762 = vpop.f32.mrf.mxu0
    %v763 = vpop.f32.mrf.mxu0
    %v764 = vadd.f32 %v570, %v763
    %v765 = vpop.f32.mrf.mxu0
    %766 = vmatprep.mubr.bf16.mxu0 0
    %767 = vmatmul.mubr.bf16.gmra.mxu0 %v718
    %v768 = vpop.f32.mrf.mxu0
    %v769 = vadd.f32 %v571, %v768
    %v770 = vpop.f32.mrf.mxu0
    %v771 = vpop.f32.mrf.mxu0
    %v772 = vadd.f32 %v572, %v771
    %v773 = vpop.f32.mrf.mxu0
    %774 = vdwg.mxu0
    %777 = vrot.lane.b32.xlu0 %v559, 112
    %v778 = vpop.permute.xlu0 %777
    %779 = vrot.lane.b32.xlu0 %v560, 112
    %v780 = vpop.permute.xlu0 %779
    %v782 = vsel %vm579, %v559, 0
    %v785 = vsel %vm579, %v560, 0
    %v788 = vsel %vm579, %v778, 0
    %v791 = vsel %vm579, %v780, 0
    %793 = vmatprep.subr.bf16.mxu0 0
    %794 = vmatpush1.bf16.xpose.msra.mxu0 0
    %795 = vmatprep.subr.bf16.mxu0 0
    %796 = vmatpush1.bf16.xpose.msra.mxu0 0
    %797 = vmatprep.subr.bf16.mxu0 0
    %798 = vmatpush1.bf16.xpose.msra.mxu0 0
    %799 = vmatprep.subr.bf16.mxu0 0
    %800 = vmatpush1.bf16.xpose.msra.mxu0 0
    %801 = vmatprep.subr.bf16.mxu0 0
    %802 = vmatpush1.bf16.xpose.msra.mxu0 0
    %803 = vmatprep.subr.bf16.mxu0 0
    %804 = vmatpush1.bf16.xpose.msra.mxu0 0
    %805 = vmatprep.subr.bf16.mxu0 0
    %806 = vmatpush1.bf16.xpose.msra.mxu0 %v791
    %807 = vmatprep.subr.bf16.mxu0 0
    %808 = vmatpush1.bf16.xpose.msra.mxu0 %v788
    %809 = vmatprep.subr.bf16.mxu0 0
    %810 = vmatpush2.bf16.xpose.msra.mxu0 0
    %811 = vmatprep.subr.bf16.mxu0 0
    %812 = vmatpush2.bf16.xpose.msra.mxu0 0
    %813 = vmatprep.subr.bf16.mxu0 0
    %814 = vmatpush2.bf16.xpose.msra.mxu0 0
    %815 = vmatprep.subr.bf16.mxu0 0
    %816 = vmatpush2.bf16.xpose.msra.mxu0 0
    %817 = vmatprep.subr.bf16.mxu0 0
    %818 = vmatpush2.bf16.xpose.msra.mxu0 0
    %819 = vmatprep.subr.bf16.mxu0 0
    %820 = vmatpush2.bf16.xpose.msra.mxu0 0
    %821 = vmatprep.subr.bf16.mxu0 0
    %822 = vmatpush2.bf16.xpose.msra.mxu0 0
    %823 = vmatprep.subr.bf16.mxu0 0
    %824 = vmatpush2.bf16.xpose.msra.mxu0 0
    %825 = vmatprep.mubr.bf16.mxu0 0
    %826 = vmatmul.mubr.bf16.gmra.mxu0 %v782
    %v827 = vpop.f32.mrf.mxu0
    %v828 = vadd.f32 %v569, %v827
    %v829 = vpop.f32.mrf.mxu0
    %v830 = vpop.f32.mrf.mxu0
    %v831 = vadd.f32 %v570, %v830
    %v832 = vpop.f32.mrf.mxu0
    %833 = vmatprep.mubr.bf16.mxu0 0
    %834 = vmatmul.mubr.bf16.gmra.mxu0 %v785
    %v835 = vpop.f32.mrf.mxu0
    %v836 = vadd.f32 %v571, %v835
    %v837 = vpop.f32.mrf.mxu0
    %v838 = vpop.f32.mrf.mxu0
    %v839 = vadd.f32 %v572, %v838
    %v840 = vpop.f32.mrf.mxu0
    %841 = vdwg.mxu0
    %vm842 = vcmask 261120
    %v843 = vsel %vm842, %v627, -inf
    %844 = vmax.xlane.f32.xlu0 %v843
    %v845 = vpop.xlane.xlu0 %844
    %v846 = vsel %vm842, %v630, -inf
    %847 = vmax.xlane.f32.xlu0 %v846
    %v848 = vpop.xlane.xlu0 %847
    %v849 = vsel %vm842, %v635, -inf
    %850 = vmax.xlane.f32.xlu0 %v849
    %v851 = vpop.xlane.xlu0 %850
    %v852 = vsel %vm842, %v638, -inf
    %853 = vmax.xlane.f32.xlu0 %v852
    %v854 = vpop.xlane.xlu0 %853
    %v855 = vsel %vm842, %v694, -inf
    %856 = vmax.xlane.f32.xlu0 %v855
    %v857 = vpop.xlane.xlu0 %856
    %v858 = vsel %vm842, %v697, -inf
    %859 = vmax.xlane.f32.xlu0 %v858
    %v860 = vpop.xlane.xlu0 %859
    %v861 = vsel %vm842, %v702, -inf
    %862 = vmax.xlane.f32.xlu0 %v861
    %v863 = vpop.xlane.xlu0 %862
    %v864 = vsel %vm842, %v705, -inf
    %865 = vmax.xlane.f32.xlu0 %v864
    %v866 = vpop.xlane.xlu0 %865
    %v867 = vsel %vm842, %v761, -inf
    %868 = vmax.xlane.f32.xlu0 %v867
    %v869 = vpop.xlane.xlu0 %868
    %v870 = vsel %vm842, %v764, -inf
    %871 = vmax.xlane.f32.xlu0 %v870
    %v872 = vpop.xlane.xlu0 %871
    %v873 = vsel %vm842, %v769, -inf
    %874 = vmax.xlane.f32.xlu0 %v873
    %v875 = vpop.xlane.xlu0 %874
    %v876 = vsel %vm842, %v772, -inf
    %877 = vmax.xlane.f32.xlu0 %v876
    %v878 = vpop.xlane.xlu0 %877
    %v879 = vsel %vm842, %v828, -inf
    %880 = vmax.xlane.f32.xlu0 %v879
    %v881 = vpop.xlane.xlu0 %880
    %v882 = vsel %vm842, %v831, -inf
    %883 = vmax.xlane.f32.xlu0 %v882
    %v884 = vpop.xlane.xlu0 %883
    %v885 = vsel %vm842, %v836, -inf
    %886 = vmax.xlane.f32.xlu0 %v885
    %v887 = vpop.xlane.xlu0 %886
    %v888 = vsel %vm842, %v839, -inf
    %889 = vmax.xlane.f32.xlu0 %v888
    %v890 = vpop.xlane.xlu0 %889
    %v891 = vsub.f32 %v627, %v845
    %v892 = vsub.f32 %v630, %v848
    %v893 = vsub.f32 %v635, %v851
    %v894 = vsub.f32 %v638, %v854
    %v895 = vsub.f32 %v694, %v857
    %v896 = vsub.f32 %v697, %v860
    %v897 = vsub.f32 %v702, %v863
    %v898 = vsub.f32 %v705, %v866
    %v899 = vsub.f32 %v761, %v869
    %v900 = vsub.f32 %v764, %v872
    %v901 = vsub.f32 %v769, %v875
    %v902 = vsub.f32 %v772, %v878
    %v903 = vsub.f32 %v828, %v881
    %v904 = vsub.f32 %v831, %v884
    %v905 = vsub.f32 %v836, %v887
    %v906 = vsub.f32 %v839, %v890
    %v907 = vmul.f32 %v891, 1.442695
    %v908 = vpow.pop %v907
    %v909 = vmul.f32 %v892, 1.442695
    %v910 = vpow.pop %v909
    %v911 = vmul.f32 %v893, 1.442695
    %v912 = vpow.pop %v911
    %v913 = vmul.f32 %v894, 1.442695
    %v914 = vpow.pop %v913
    %v915 = vmul.f32 %v895, 1.442695
    %v916 = vpow.pop %v915
    %v917 = vmul.f32 %v896, 1.442695
    %v918 = vpow.pop %v917
    %v919 = vmul.f32 %v897, 1.442695
    %v920 = vpow.pop %v919
    %v921 = vmul.f32 %v898, 1.442695
    %v922 = vpow.pop %v921
    %v923 = vmul.f32 %v899, 1.442695
    %v924 = vpow.pop %v923
    %v925 = vmul.f32 %v900, 1.442695
    %v926 = vpow.pop %v925
    %v927 = vmul.f32 %v901, 1.442695
    %v928 = vpow.pop %v927
    %v929 = vmul.f32 %v902, 1.442695
    %v930 = vpow.pop %v929
    %v931 = vmul.f32 %v903, 1.442695
    %v932 = vpow.pop %v931
    %v933 = vmul.f32 %v904, 1.442695
    %v934 = vpow.pop %v933
    %v935 = vmul.f32 %v905, 1.442695
    %v936 = vpow.pop %v935
    %v937 = vmul.f32 %v906, 1.442695
    %v938 = vpow.pop %v937
    %v939 = vsel %vm842, %v908, 0.0
    %940 = vadd.xlane.f32.xlu0 %v939
    %v941 = vpop.xlane.xlu0 %940
    %v942 = vsel %vm842, %v910, 0.0
    %943 = vadd.xlane.f32.xlu0 %v942
    %v944 = vpop.xlane.xlu0 %943
    %v945 = vsel %vm842, %v912, 0.0
    %946 = vadd.xlane.f32.xlu0 %v945
    %v947 = vpop.xlane.xlu0 %946
    %v948 = vsel %vm842, %v914, 0.0
    %949 = vadd.xlane.f32.xlu0 %v948
    %v950 = vpop.xlane.xlu0 %949
    %v951 = vsel %vm842, %v916, 0.0
    %952 = vadd.xlane.f32.xlu0 %v951
    %v953 = vpop.xlane.xlu0 %952
    %v954 = vsel %vm842, %v918, 0.0
    %955 = vadd.xlane.f32.xlu0 %v954
    %v956 = vpop.xlane.xlu0 %955
    %v957 = vsel %vm842, %v920, 0.0
    %958 = vadd.xlane.f32.xlu0 %v957
    %v959 = vpop.xlane.xlu0 %958
    %v960 = vsel %vm842, %v922, 0.0
    %961 = vadd.xlane.f32.xlu0 %v960
    %v962 = vpop.xlane.xlu0 %961
    %v963 = vsel %vm842, %v924, 0.0
    %964 = vadd.xlane.f32.xlu0 %v963
    %v965 = vpop.xlane.xlu0 %964
    %v966 = vsel %vm842, %v926, 0.0
    %967 = vadd.xlane.f32.xlu0 %v966
    %v968 = vpop.xlane.xlu0 %967
    %v969 = vsel %vm842, %v928, 0.0
    %970 = vadd.xlane.f32.xlu0 %v969
    %v971 = vpop.xlane.xlu0 %970
    %v972 = vsel %vm842, %v930, 0.0
    %973 = vadd.xlane.f32.xlu0 %v972
    %v974 = vpop.xlane.xlu0 %973
    %v975 = vsel %vm842, %v932, 0.0
    %976 = vadd.xlane.f32.xlu0 %v975
    %v977 = vpop.xlane.xlu0 %976
    %v978 = vsel %vm842, %v934, 0.0
    %979 = vadd.xlane.f32.xlu0 %v978
    %v980 = vpop.xlane.xlu0 %979
    %v981 = vsel %vm842, %v936, 0.0
    %982 = vadd.xlane.f32.xlu0 %v981
    %v983 = vpop.xlane.xlu0 %982
    %v984 = vsel %vm842, %v938, 0.0
    %985 = vadd.xlane.f32.xlu0 %v984
    %v986 = vpop.xlane.xlu0 %985
    %v987 = vrcp.pop %v941
    %v988 = vrcp.pop %v944
    %v989 = vrcp.pop %v947
    %v990 = vrcp.pop %v950
    %v991 = vrcp.pop %v953
    %v992 = vrcp.pop %v956
    %v993 = vrcp.pop %v959
    %v994 = vrcp.pop %v962
    %v995 = vrcp.pop %v965
    %v996 = vrcp.pop %v968
    %v997 = vrcp.pop %v971
    %v998 = vrcp.pop %v974
    %v999 = vrcp.pop %v977
    %v1000 = vrcp.pop %v980
    %v1001 = vrcp.pop %v983
    %v1002 = vrcp.pop %v986
    %v1003 = vpack.c.bf16 %v910, %v908
    %v1004 = vpack.c.bf16 %v914, %v912
    %v1005 = vpack.c.bf16 %v918, %v916
    %v1006 = vpack.c.bf16 %v922, %v920
    %v1007 = vpack.c.bf16 %v926, %v924
    %v1008 = vpack.c.bf16 %v930, %v928
    %v1009 = vpack.c.bf16 %v934, %v932
    %v1010 = vpack.c.bf16 %v938, %v936
    %1013 = vrot.lane.b32.xlu0 %v561, 64
    %v1014 = vpop.permute.xlu0 %1013
    %1015 = vrot.lane.b32.xlu0 %v562, 64
    %v1016 = vpop.permute.xlu0 %1015
    %v1020 = vsel %vm842, %v1003, 0
    %v1023 = vsel %vm842, %v1004, 0
    %1025 = vmatprep.subr.bf16.mxu0 0
    %1026 = vmatpush1.bf16.msra.mxu0 0
    %1027 = vmatprep.subr.bf16.mxu0 0
    %1028 = vmatpush1.bf16.msra.mxu0 0
    %1029 = vmatprep.subr.bf16.mxu0 0
    %1030 = vmatpush1.bf16.msra.mxu0 0
    %1031 = vmatprep.subr.bf16.mxu0 0
    %1032 = vmatpush1.bf16.msra.mxu0 0
    %1033 = vmatprep.subr.bf16.mxu0 0
    %1034 = vmatpush1.bf16.msra.mxu0 0
    %1035 = vmatprep.subr.bf16.mxu0 0
    %1036 = vmatpush1.bf16.msra.mxu0 0
    %1037 = vmatprep.subr.bf16.mxu0 0
    %1038 = vmatpush1.bf16.msra.mxu0 %v1016
    %1039 = vmatprep.subr.bf16.mxu0 0
    %1040 = vmatpush1.bf16.msra.mxu0 %v1014
    %1041 = vmatprep.subr.bf16.mxu0 0
    %1042 = vmatpush2.bf16.msra.mxu0 0
    %1043 = vmatprep.subr.bf16.mxu0 0
    %1044 = vmatpush2.bf16.msra.mxu0 0
    %1045 = vmatprep.subr.bf16.mxu0 0
    %1046 = vmatpush2.bf16.msra.mxu0 0
    %1047 = vmatprep.subr.bf16.mxu0 0
    %1048 = vmatpush2.bf16.msra.mxu0 0
    %1049 = vmatprep.subr.bf16.mxu0 0
    %1050 = vmatpush2.bf16.msra.mxu0 0
    %1051 = vmatprep.subr.bf16.mxu0 0
    %1052 = vmatpush2.bf16.msra.mxu0 0
    %1053 = vmatprep.subr.bf16.mxu0 0
    %1054 = vmatpush2.bf16.msra.mxu0 0
    %1055 = vmatprep.subr.bf16.mxu0 0
    %1056 = vmatpush2.bf16.msra.mxu0 0
    %1057 = vmatprep.mubr.bf16.mxu0 0
    %1058 = vmatmul.mubr.bf16.gmra.mxu0 %v1020
    %v1059 = vpop.f32.mrf.mxu0
    %v1060 = vadd.f32 0.0, %v1059
    %v1061 = vpop.f32.mrf.mxu0
    %v1062 = vpop.f32.mrf.mxu0
    %v1063 = vadd.f32 0.0, %v1062
    %v1064 = vpop.f32.mrf.mxu0
    %1065 = vmatprep.mubr.bf16.mxu0 0
    %1066 = vmatmul.mubr.bf16.gmra.mxu0 %v1023
    %v1067 = vpop.f32.mrf.mxu0
    %v1068 = vadd.f32 0.0, %v1067
    %v1069 = vpop.f32.mrf.mxu0
    %v1070 = vpop.f32.mrf.mxu0
    %v1071 = vadd.f32 0.0, %v1070
    %v1072 = vpop.f32.mrf.mxu0
    %1073 = vdwg.mxu0
    %1076 = vrot.lane.b32.xlu0 %v563, 64
    %v1077 = vpop.permute.xlu0 %1076
    %1078 = vrot.lane.b32.xlu0 %v564, 64
    %v1079 = vpop.permute.xlu0 %1078
    %v1083 = vsel %vm842, %v1005, 0
    %v1086 = vsel %vm842, %v1006, 0
    %1088 = vmatprep.subr.bf16.mxu0 0
    %1089 = vmatpush1.bf16.msra.mxu0 0
    %1090 = vmatprep.subr.bf16.mxu0 0
    %1091 = vmatpush1.bf16.msra.mxu0 0
    %1092 = vmatprep.subr.bf16.mxu0 0
    %1093 = vmatpush1.bf16.msra.mxu0 0
    %1094 = vmatprep.subr.bf16.mxu0 0
    %1095 = vmatpush1.bf16.msra.mxu0 0
    %1096 = vmatprep.subr.bf16.mxu0 0
    %1097 = vmatpush1.bf16.msra.mxu0 0
    %1098 = vmatprep.subr.bf16.mxu0 0
    %1099 = vmatpush1.bf16.msra.mxu0 0
    %1100 = vmatprep.subr.bf16.mxu0 0
    %1101 = vmatpush1.bf16.msra.mxu0 %v1079
    %1102 = vmatprep.subr.bf16.mxu0 0
    %1103 = vmatpush1.bf16.msra.mxu0 %v1077
    %1104 = vmatprep.subr.bf16.mxu0 0
    %1105 = vmatpush2.bf16.msra.mxu0 0
    %1106 = vmatprep.subr.bf16.mxu0 0
    %1107 = vmatpush2.bf16.msra.mxu0 0
    %1108 = vmatprep.subr.bf16.mxu0 0
    %1109 = vmatpush2.bf16.msra.mxu0 0
    %1110 = vmatprep.subr.bf16.mxu0 0
    %1111 = vmatpush2.bf16.msra.mxu0 0
    %1112 = vmatprep.subr.bf16.mxu0 0
    %1113 = vmatpush2.bf16.msra.mxu0 0
    %1114 = vmatprep.subr.bf16.mxu0 0
    %1115 = vmatpush2.bf16.msra.mxu0 0
    %1116 = vmatprep.subr.bf16.mxu0 0
    %1117 = vmatpush2.bf16.msra.mxu0 0
    %1118 = vmatprep.subr.bf16.mxu0 0
    %1119 = vmatpush2.bf16.msra.mxu0 0
    %1120 = vmatprep.mubr.bf16.mxu0 0
    %1121 = vmatmul.mubr.bf16.gmra.mxu0 %v1083
    %v1122 = vpop.f32.mrf.mxu0
    %v1123 = vadd.f32 0.0, %v1122
    %v1124 = vpop.f32.mrf.mxu0
    %v1125 = vpop.f32.mrf.mxu0
    %v1126 = vadd.f32 0.0, %v1125
    %v1127 = vpop.f32.mrf.mxu0
    %1128 = vmatprep.mubr.bf16.mxu0 0
    %1129 = vmatmul.mubr.bf16.gmra.mxu0 %v1086
    %v1130 = vpop.f32.mrf.mxu0
    %v1131 = vadd.f32 0.0, %v1130
    %v1132 = vpop.f32.mrf.mxu0
    %v1133 = vpop.f32.mrf.mxu0
    %v1134 = vadd.f32 0.0, %v1133
    %v1135 = vpop.f32.mrf.mxu0
    %1136 = vdwg.mxu0
    %1139 = vrot.lane.b32.xlu0 %v565, 64
    %v1140 = vpop.permute.xlu0 %1139
    %1141 = vrot.lane.b32.xlu0 %v566, 64
    %v1142 = vpop.permute.xlu0 %1141
    %v1146 = vsel %vm842, %v1007, 0
    %v1149 = vsel %vm842, %v1008, 0
    %1151 = vmatprep.subr.bf16.mxu0 0
    %1152 = vmatpush1.bf16.msra.mxu0 0
    %1153 = vmatprep.subr.bf16.mxu0 0
    %1154 = vmatpush1.bf16.msra.mxu0 0
    %1155 = vmatprep.subr.bf16.mxu0 0
    %1156 = vmatpush1.bf16.msra.mxu0 0
    %1157 = vmatprep.subr.bf16.mxu0 0
    %1158 = vmatpush1.bf16.msra.mxu0 0
    %1159 = vmatprep.subr.bf16.mxu0 0
    %1160 = vmatpush1.bf16.msra.mxu0 0
    %1161 = vmatprep.subr.bf16.mxu0 0
    %1162 = vmatpush1.bf16.msra.mxu0 0
    %1163 = vmatprep.subr.bf16.mxu0 0
    %1164 = vmatpush1.bf16.msra.mxu0 %v1142
    %1165 = vmatprep.subr.bf16.mxu0 0
    %1166 = vmatpush1.bf16.msra.mxu0 %v1140
    %1167 = vmatprep.subr.bf16.mxu0 0
    %1168 = vmatpush2.bf16.msra.mxu0 0
    %1169 = vmatprep.subr.bf16.mxu0 0
    %1170 = vmatpush2.bf16.msra.mxu0 0
    %1171 = vmatprep.subr.bf16.mxu0 0
    %1172 = vmatpush2.bf16.msra.mxu0 0
    %1173 = vmatprep.subr.bf16.mxu0 0
    %1174 = vmatpush2.bf16.msra.mxu0 0
    %1175 = vmatprep.subr.bf16.mxu0 0
    %1176 = vmatpush2.bf16.msra.mxu0 0
    %1177 = vmatprep.subr.bf16.mxu0 0
    %1178 = vmatpush2.bf16.msra.mxu0 0
    %1179 = vmatprep.subr.bf16.mxu0 0
    %1180 = vmatpush2.bf16.msra.mxu0 0
    %1181 = vmatprep.subr.bf16.mxu0 0
    %1182 = vmatpush2.bf16.msra.mxu0 0
    %1183 = vmatprep.mubr.bf16.mxu0 0
    %1184 = vmatmul.mubr.bf16.gmra.mxu0 %v1146
    %v1185 = vpop.f32.mrf.mxu0
    %v1186 = vadd.f32 0.0, %v1185
    %v1187 = vpop.f32.mrf.mxu0
    %v1188 = vpop.f32.mrf.mxu0
    %v1189 = vadd.f32 0.0, %v1188
    %v1190 = vpop.f32.mrf.mxu0
    %1191 = vmatprep.mubr.bf16.mxu0 0
    %1192 = vmatmul.mubr.bf16.gmra.mxu0 %v1149
    %v1193 = vpop.f32.mrf.mxu0
    %v1194 = vadd.f32 0.0, %v1193
    %v1195 = vpop.f32.mrf.mxu0
    %v1196 = vpop.f32.mrf.mxu0
    %v1197 = vadd.f32 0.0, %v1196
    %v1198 = vpop.f32.mrf.mxu0
    %1199 = vdwg.mxu0
    %1202 = vrot.lane.b32.xlu0 %v567, 64
    %v1203 = vpop.permute.xlu0 %1202
    %1204 = vrot.lane.b32.xlu0 %v568, 64
    %v1205 = vpop.permute.xlu0 %1204
    %v1209 = vsel %vm842, %v1009, 0
    %v1212 = vsel %vm842, %v1010, 0
    %1214 = vmatprep.subr.bf16.mxu0 0
    %1215 = vmatpush1.bf16.msra.mxu0 0
    %1216 = vmatprep.subr.bf16.mxu0 0
    %1217 = vmatpush1.bf16.msra.mxu0 0
    %1218 = vmatprep.subr.bf16.mxu0 0
    %1219 = vmatpush1.bf16.msra.mxu0 0
    %1220 = vmatprep.subr.bf16.mxu0 0
    %1221 = vmatpush1.bf16.msra.mxu0 0
    %1222 = vmatprep.subr.bf16.mxu0 0
    %1223 = vmatpush1.bf16.msra.mxu0 0
    %1224 = vmatprep.subr.bf16.mxu0 0
    %1225 = vmatpush1.bf16.msra.mxu0 0
    %1226 = vmatprep.subr.bf16.mxu0 0
    %1227 = vmatpush1.bf16.msra.mxu0 %v1205
    %1228 = vmatprep.subr.bf16.mxu0 0
    %1229 = vmatpush1.bf16.msra.mxu0 %v1203
    %1230 = vmatprep.subr.bf16.mxu0 0
    %1231 = vmatpush2.bf16.msra.mxu0 0
    %1232 = vmatprep.subr.bf16.mxu0 0
    %1233 = vmatpush2.bf16.msra.mxu0 0
    %1234 = vmatprep.subr.bf16.mxu0 0
    %1235 = vmatpush2.bf16.msra.mxu0 0
    %1236 = vmatprep.subr.bf16.mxu0 0
    %1237 = vmatpush2.bf16.msra.mxu0 0
    %1238 = vmatprep.subr.bf16.mxu0 0
    %1239 = vmatpush2.bf16.msra.mxu0 0
    %1240 = vmatprep.subr.bf16.mxu0 0
    %1241 = vmatpush2.bf16.msra.mxu0 0
    %1242 = vmatprep.subr.bf16.mxu0 0
    %1243 = vmatpush2.bf16.msra.mxu0 0
    %1244 = vmatprep.subr.bf16.mxu0 0
    %1245 = vmatpush2.bf16.msra.mxu0 0
    %1246 = vmatprep.mubr.bf16.mxu0 0
    %1247 = vmatmul.mubr.bf16.gmra.mxu0 %v1209
    %v1248 = vpop.f32.mrf.mxu0
    %v1249 = vadd.f32 0.0, %v1248
    %v1250 = vpop.f32.mrf.mxu0
    %v1251 = vpop.f32.mrf.mxu0
    %v1252 = vadd.f32 0.0, %v1251
    %v1253 = vpop.f32.mrf.mxu0
    %1254 = vmatprep.mubr.bf16.mxu0 0
    %1255 = vmatmul.mubr.bf16.gmra.mxu0 %v1212
    %v1256 = vpop.f32.mrf.mxu0
    %v1257 = vadd.f32 0.0, %v1256
    %v1258 = vpop.f32.mrf.mxu0
    %v1259 = vpop.f32.mrf.mxu0
    %v1260 = vadd.f32 0.0, %v1259
    %v1261 = vpop.f32.mrf.mxu0
    %1262 = vdwg.mxu0
    %v1263 = vmul.f32 %v1060, %v987
    %v1264 = vmul.f32 %v1063, %v988
    %v1265 = vmul.f32 %v1068, %v989
    %v1266 = vmul.f32 %v1071, %v990
    %v1267 = vmul.f32 %v1123, %v991
    %v1268 = vmul.f32 %v1126, %v992
    %v1269 = vmul.f32 %v1131, %v993
    %v1270 = vmul.f32 %v1134, %v994
    %v1271 = vmul.f32 %v1186, %v995
    %v1272 = vmul.f32 %v1189, %v996
    %v1273 = vmul.f32 %v1194, %v997
    %v1274 = vmul.f32 %v1197, %v998
    %v1275 = vmul.f32 %v1249, %v999
    %v1276 = vmul.f32 %v1252, %v1000
    %v1277 = vmul.f32 %v1257, %v1001
    %v1278 = vmul.f32 %v1260, %v1002
    %v1279 = vpack.c.bf16 %v1264, %v1263
    %v1280 = vpack.c.bf16 %v1266, %v1265
    %v1281 = vpack.c.bf16 %v1268, %v1267
    %v1282 = vpack.c.bf16 %v1270, %v1269
    %v1283 = vpack.c.bf16 %v1272, %v1271
    %v1284 = vpack.c.bf16 %v1274, %v1273
    %v1285 = vpack.c.bf16 %v1276, %v1275
    %v1286 = vpack.c.bf16 %v1278, %v1277
    %v1287 = vld [vmem:[#allocation8] sm:$0xf]
    %v1288 = vld [vmem:[#allocation8 + $0x4] sm:$0xf]
    %v1289 = vld [vmem:[#allocation8 + $0x8] sm:$0xf]
    %v1290 = vld [vmem:[#allocation8 + $0xc] sm:$0xf]
    %v1291 = vld [vmem:[#allocation8 + $0x10] sm:$0xf]
    %v1292 = vld [vmem:[#allocation8 + $0x14] sm:$0xf]
    %v1293 = vld [vmem:[#allocation8 + $0x18] sm:$0xf]
    %v1294 = vld [vmem:[#allocation8 + $0x1c] sm:$0xf]
    %v1297 = vunpack.c.l.b16 %v1287
    %v1298 = vunpack.c.l.b16 %v1288
    %v1299 = vpack.c.b16 %v1298, %v1297
    %v1302 = vsel %vm579, %v1279, 0
    %v1305 = vsel %vm579, %v1280, 0
    %1307 = vmatprep.subr.bf16.mxu0 0
    %1308 = vmatpush1.bf16.msra.mxu0 0
    %1309 = vmatprep.subr.bf16.mxu0 0
    %1310 = vmatpush1.bf16.msra.mxu0 0
    %1311 = vmatprep.subr.bf16.mxu0 0
    %1312 = vmatpush1.bf16.msra.mxu0 0
    %1313 = vmatprep.subr.bf16.mxu0 0
    %1314 = vmatpush1.bf16.msra.mxu0 0
    %1315 = vmatprep.subr.bf16.mxu0 0
    %1316 = vmatpush1.bf16.msra.mxu0 0
    %1317 = vmatprep.subr.bf16.mxu0 0
    %1318 = vmatpush1.bf16.msra.mxu0 0
    %1319 = vmatprep.subr.bf16.mxu0 0
    %1320 = vmatpush1.bf16.msra.mxu0 0
    %1321 = vmatprep.subr.bf16.mxu0 0
    %1322 = vmatpush1.bf16.msra.mxu0 %v1299
    %1323 = vmatprep.subr.bf16.mxu0 0
    %1324 = vmatpush2.bf16.msra.mxu0 0
    %1325 = vmatprep.subr.bf16.mxu0 0
    %1326 = vmatpush2.bf16.msra.mxu0 0
    %1327 = vmatprep.subr.bf16.mxu0 0
    %1328 = vmatpush2.bf16.msra.mxu0 0
    %1329 = vmatprep.subr.bf16.mxu0 0
    %1330 = vmatpush2.bf16.msra.mxu0 0
    %1331 = vmatprep.subr.bf16.mxu0 0
    %1332 = vmatpush2.bf16.msra.mxu0 0
    %1333 = vmatprep.subr.bf16.mxu0 0
    %1334 = vmatpush2.bf16.msra.mxu0 0
    %1335 = vmatprep.subr.bf16.mxu0 0
    %1336 = vmatpush2.bf16.msra.mxu0 0
    %1337 = vmatprep.subr.bf16.mxu0 0
    %1338 = vmatpush2.bf16.msra.mxu0 0
    %1339 = vmatprep.mubr.bf16.mxu0 0
    %1340 = vmatmul.mubr.bf16.gmra.mxu0 %v1302
    %v1341 = vpop.f32.mrf.mxu0
    %v1342 = vadd.f32 0.0, %v1341
    %v1343 = vpop.f32.mrf.mxu0
    %v1344 = vpop.f32.mrf.mxu0
    %v1345 = vadd.f32 0.0, %v1344
    %v1346 = vpop.f32.mrf.mxu0
    %1347 = vmatprep.mubr.bf16.mxu0 0
    %1348 = vmatmul.mubr.bf16.gmra.mxu0 %v1305
    %v1349 = vpop.f32.mrf.mxu0
    %v1350 = vadd.f32 0.0, %v1349
    %v1351 = vpop.f32.mrf.mxu0
    %v1352 = vpop.f32.mrf.mxu0
    %v1353 = vadd.f32 0.0, %v1352
    %v1354 = vpop.f32.mrf.mxu0
    %1355 = vdwg.mxu0
    %v1358 = vunpack.c.l.b16 %v1289
    %v1359 = vunpack.c.l.b16 %v1290
    %v1360 = vpack.c.b16 %v1359, %v1358
    %v1363 = vsel %vm579, %v1281, 0
    %v1366 = vsel %vm579, %v1282, 0
    %1368 = vmatprep.subr.bf16.mxu0 0
    %1369 = vmatpush1.bf16.msra.mxu0 0
    %1370 = vmatprep.subr.bf16.mxu0 0
    %1371 = vmatpush1.bf16.msra.mxu0 0
    %1372 = vmatprep.subr.bf16.mxu0 0
    %1373 = vmatpush1.bf16.msra.mxu0 0
    %1374 = vmatprep.subr.bf16.mxu0 0
    %1375 = vmatpush1.bf16.msra.mxu0 0
    %1376 = vmatprep.subr.bf16.mxu0 0
    %1377 = vmatpush1.bf16.msra.mxu0 0
    %1378 = vmatprep.subr.bf16.mxu0 0
    %1379 = vmatpush1.bf16.msra.mxu0 0
    %1380 = vmatprep.subr.bf16.mxu0 0
    %1381 = vmatpush1.bf16.msra.mxu0 0
    %1382 = vmatprep.subr.bf16.mxu0 0
    %1383 = vmatpush1.bf16.msra.mxu0 %v1360
    %1384 = vmatprep.subr.bf16.mxu0 0
    %1385 = vmatpush2.bf16.msra.mxu0 0
    %1386 = vmatprep.subr.bf16.mxu0 0
    %1387 = vmatpush2.bf16.msra.mxu0 0
    %1388 = vmatprep.subr.bf16.mxu0 0
    %1389 = vmatpush2.bf16.msra.mxu0 0
    %1390 = vmatprep.subr.bf16.mxu0 0
    %1391 = vmatpush2.bf16.msra.mxu0 0
    %1392 = vmatprep.subr.bf16.mxu0 0
    %1393 = vmatpush2.bf16.msra.mxu0 0
    %1394 = vmatprep.subr.bf16.mxu0 0
    %1395 = vmatpush2.bf16.msra.mxu0 0
    %1396 = vmatprep.subr.bf16.mxu0 0
    %1397 = vmatpush2.bf16.msra.mxu0 0
    %1398 = vmatprep.subr.bf16.mxu0 0
    %1399 = vmatpush2.bf16.msra.mxu0 0
    %1400 = vmatprep.mubr.bf16.mxu0 0
    %1401 = vmatmul.mubr.bf16.gmra.mxu0 %v1363
    %v1402 = vpop.f32.mrf.mxu0
    %v1403 = vadd.f32 0.0, %v1402
    %v1404 = vpop.f32.mrf.mxu0
    %v1405 = vpop.f32.mrf.mxu0
    %v1406 = vadd.f32 0.0, %v1405
    %v1407 = vpop.f32.mrf.mxu0
    %1408 = vmatprep.mubr.bf16.mxu0 0
    %1409 = vmatmul.mubr.bf16.gmra.mxu0 %v1366
    %v1410 = vpop.f32.mrf.mxu0
    %v1411 = vadd.f32 0.0, %v1410
    %v1412 = vpop.f32.mrf.mxu0
    %v1413 = vpop.f32.mrf.mxu0
    %v1414 = vadd.f32 0.0, %v1413
    %v1415 = vpop.f32.mrf.mxu0
    %1416 = vdwg.mxu0
    %v1419 = vunpack.c.l.b16 %v1291
    %v1420 = vunpack.c.l.b16 %v1292
    %v1421 = vpack.c.b16 %v1420, %v1419
    %v1424 = vsel %vm579, %v1283, 0
    %v1427 = vsel %vm579, %v1284, 0
    %1429 = vmatprep.subr.bf16.mxu0 0
    %1430 = vmatpush1.bf16.msra.mxu0 0
    %1431 = vmatprep.subr.bf16.mxu0 0
    %1432 = vmatpush1.bf16.msra.mxu0 0
    %1433 = vmatprep.subr.bf16.mxu0 0
    %1434 = vmatpush1.bf16.msra.mxu0 0
    %1435 = vmatprep.subr.bf16.mxu0 0
    %1436 = vmatpush1.bf16.msra.mxu0 0
    %1437 = vmatprep.subr.bf16.mxu0 0
    %1438 = vmatpush1.bf16.msra.mxu0 0
    %1439 = vmatprep.subr.bf16.mxu0 0
    %1440 = vmatpush1.bf16.msra.mxu0 0
    %1441 = vmatprep.subr.bf16.mxu0 0
    %1442 = vmatpush1.bf16.msra.mxu0 0
    %1443 = vmatprep.subr.bf16.mxu0 0
    %1444 = vmatpush1.bf16.msra.mxu0 %v1421
    %1445 = vmatprep.subr.bf16.mxu0 0
    %1446 = vmatpush2.bf16.msra.mxu0 0
    %1447 = vmatprep.subr.bf16.mxu0 0
    %1448 = vmatpush2.bf16.msra.mxu0 0
    %1449 = vmatprep.subr.bf16.mxu0 0
    %1450 = vmatpush2.bf16.msra.mxu0 0
    %1451 = vmatprep.subr.bf16.mxu0 0
    %1452 = vmatpush2.bf16.msra.mxu0 0
    %1453 = vmatprep.subr.bf16.mxu0 0
    %1454 = vmatpush2.bf16.msra.mxu0 0
    %1455 = vmatprep.subr.bf16.mxu0 0
    %1456 = vmatpush2.bf16.msra.mxu0 0
    %1457 = vmatprep.subr.bf16.mxu0 0
    %1458 = vmatpush2.bf16.msra.mxu0 0
    %1459 = vmatprep.subr.bf16.mxu0 0
    %1460 = vmatpush2.bf16.msra.mxu0 0
    %1461 = vmatprep.mubr.bf16.mxu0 0
    %1462 = vmatmul.mubr.bf16.gmra.mxu0 %v1424
    %v1463 = vpop.f32.mrf.mxu0
    %v1464 = vadd.f32 0.0, %v1463
    %v1465 = vpop.f32.mrf.mxu0
    %v1466 = vpop.f32.mrf.mxu0
    %v1467 = vadd.f32 0.0, %v1466
    %v1468 = vpop.f32.mrf.mxu0
    %1469 = vmatprep.mubr.bf16.mxu0 0
    %1470 = vmatmul.mubr.bf16.gmra.mxu0 %v1427
    %v1471 = vpop.f32.mrf.mxu0
    %v1472 = vadd.f32 0.0, %v1471
    %v1473 = vpop.f32.mrf.mxu0
    %v1474 = vpop.f32.mrf.mxu0
    %v1475 = vadd.f32 0.0, %v1474
    %v1476 = vpop.f32.mrf.mxu0
    %1477 = vdwg.mxu0
    %v1480 = vunpack.c.l.b16 %v1293
    %v1481 = vunpack.c.l.b16 %v1294
    %v1482 = vpack.c.b16 %v1481, %v1480
    %v1485 = vsel %vm579, %v1285, 0
    %v1488 = vsel %vm579, %v1286, 0
    %1490 = vmatprep.subr.bf16.mxu0 0
    %1491 = vmatpush1.bf16.msra.mxu0 0
    %1492 = vmatprep.subr.bf16.mxu0 0
    %1493 = vmatpush1.bf16.msra.mxu0 0
    %1494 = vmatprep.subr.bf16.mxu0 0
    %1495 = vmatpush1.bf16.msra.mxu0 0
    %1496 = vmatprep.subr.bf16.mxu0 0
    %1497 = vmatpush1.bf16.msra.mxu0 0
    %1498 = vmatprep.subr.bf16.mxu0 0
    %1499 = vmatpush1.bf16.msra.mxu0 0
    %1500 = vmatprep.subr.bf16.mxu0 0
    %1501 = vmatpush1.bf16.msra.mxu0 0
    %1502 = vmatprep.subr.bf16.mxu0 0
    %1503 = vmatpush1.bf16.msra.mxu0 0
    %1504 = vmatprep.subr.bf16.mxu0 0
    %1505 = vmatpush1.bf16.msra.mxu0 %v1482
    %1506 = vmatprep.subr.bf16.mxu0 0
    %1507 = vmatpush2.bf16.msra.mxu0 0
    %1508 = vmatprep.subr.bf16.mxu0 0
    %1509 = vmatpush2.bf16.msra.mxu0 0
    %1510 = vmatprep.subr.bf16.mxu0 0
    %1511 = vmatpush2.bf16.msra.mxu0 0
    %1512 = vmatprep.subr.bf16.mxu0 0
    %1513 = vmatpush2.bf16.msra.mxu0 0
    %1514 = vmatprep.subr.bf16.mxu0 0
    %1515 = vmatpush2.bf16.msra.mxu0 0
    %1516 = vmatprep.subr.bf16.mxu0 0
    %1517 = vmatpush2.bf16.msra.mxu0 0
    %1518 = vmatprep.subr.bf16.mxu0 0
    %1519 = vmatpush2.bf16.msra.mxu0 0
    %1520 = vmatprep.subr.bf16.mxu0 0
    %1521 = vmatpush2.bf16.msra.mxu0 0
    %1522 = vmatprep.mubr.bf16.mxu0 0
    %1523 = vmatmul.mubr.bf16.gmra.mxu0 %v1485
    %v1524 = vpop.f32.mrf.mxu0
    %v1525 = vadd.f32 0.0, %v1524
    %v1526 = vpop.f32.mrf.mxu0
    %v1527 = vpop.f32.mrf.mxu0
    %v1528 = vadd.f32 0.0, %v1527
    %v1529 = vpop.f32.mrf.mxu0
    %1530 = vmatprep.mubr.bf16.mxu0 0
    %1531 = vmatmul.mubr.bf16.gmra.mxu0 %v1488
    %v1532 = vpop.f32.mrf.mxu0
    %v1533 = vadd.f32 0.0, %v1532
    %v1534 = vpop.f32.mrf.mxu0
    %v1535 = vpop.f32.mrf.mxu0
    %v1536 = vadd.f32 0.0, %v1535
    %v1537 = vpop.f32.mrf.mxu0
    %1538 = vdwg.mxu0
    %v1539 = vsel %vm91, %v1342, 0.0
    %v1540 = vsel %vm91, %v1403, 0.0
    %v1541 = vadd.f32 %v1539, %v1540
    %v1542 = vsel %vm91, %v1464, 0.0
    %v1543 = vadd.f32 %v1541, %v1542
    %v1544 = vsel %vm91, %v1525, 0.0
    %v1545 = vadd.f32 %v1543, %v1544
    %v1546 = vsel %vm91, %v1345, 0.0
    %v1547 = vsel %vm91, %v1406, 0.0
    %v1548 = vadd.f32 %v1546, %v1547
    %v1549 = vsel %vm91, %v1467, 0.0
    %v1550 = vadd.f32 %v1548, %v1549
    %v1551 = vsel %vm91, %v1528, 0.0
    %v1552 = vadd.f32 %v1550, %v1551
    %v1553 = vsel %vm91, %v1350, 0.0
    %v1554 = vsel %vm91, %v1411, 0.0
    %v1555 = vadd.f32 %v1553, %v1554
    %v1556 = vsel %vm91, %v1472, 0.0
    %v1557 = vadd.f32 %v1555, %v1556
    %v1558 = vsel %vm91, %v1533, 0.0
    %v1559 = vadd.f32 %v1557, %v1558
    %v1560 = vsel %vm91, %v1353, 0.0
    %v1561 = vsel %vm91, %v1414, 0.0
    %v1562 = vadd.f32 %v1560, %v1561
    %v1563 = vsel %vm91, %v1475, 0.0
    %v1564 = vadd.f32 %v1562, %v1563
    %v1565 = vsel %vm91, %v1536, 0.0
    %v1566 = vadd.f32 %v1564, %v1565
    %v1567 = vadd.f32 %v83, %v1545
    %v1568 = vadd.f32 %v84, %v1552
    %v1569 = vadd.f32 %v85, %v1559
    %v1570 = vadd.f32 %v86, %v1566
    %v1571 = vmul.f32 %v1567, %v1567
    %v1572 = vmul.f32 %v1568, %v1568
    %v1573 = vmul.f32 %v1569, %v1569
    %v1574 = vmul.f32 %v1570, %v1570
    %v1575 = vsel %vm91, %v1571, 0.0
    %1576 = vadd.xlane.f32.xlu0 %v1575
    %v1577 = vpop.xlane.xlu0 %1576
    %v1578 = vsel %vm91, %v1572, 0.0
    %1579 = vadd.xlane.f32.xlu0 %v1578
    %v1580 = vpop.xlane.xlu0 %1579
    %v1581 = vsel %vm91, %v1573, 0.0
    %1582 = vadd.xlane.f32.xlu0 %v1581
    %v1583 = vpop.xlane.xlu0 %1582
    %v1584 = vsel %vm91, %v1574, 0.0
    %1585 = vadd.xlane.f32.xlu0 %v1584
    %v1586 = vpop.xlane.xlu0 %1585
    %v1587 = vmul.f32 %v1577, %v104
    %v1588 = vmul.f32 %v1580, %v104
    %v1589 = vmul.f32 %v1583, %v104
    %v1590 = vmul.f32 %v1586, %v104
    %v1591 = vadd.f32 %v1587, 1e-05
    %v1592 = vadd.f32 %v1588, 1e-05
    %v1593 = vadd.f32 %v1589, 1e-05
    %v1594 = vadd.f32 %v1590, 1e-05
    %v1595 = vrsqrt.pop %v1591
    %v1596 = vrsqrt.pop %v1592
    %v1597 = vrsqrt.pop %v1593
    %v1598 = vrsqrt.pop %v1594
    %v1599 = vmul.f32 %v1567, %v1595
    %v1600 = vmul.f32 %v1568, %v1596
    %v1601 = vmul.f32 %v1569, %v1597
    %v1602 = vmul.f32 %v1570, %v1598
    %v1603 = vpack.c.bf16 %v1600, %v1599
    %v1604 = vpack.c.bf16 %v1602, %v1601
    %v1605 = vld [vmem:[%s5] sm:$0xff]
    %v1606 = vld [vmem:[%s5 + $0x8] sm:$0xff]
    %v1607 = vld [vmem:[%s5 + $0x10] sm:$0xff]
    %v1608 = vld [vmem:[%s5 + $0x18] sm:$0xff]
    %v1609 = vld [vmem:[%s5 + $0x20] sm:$0xff]
    %v1610 = vld [vmem:[%s5 + $0x28] sm:$0xff]
    %v1611 = vld [vmem:[%s5 + $0x30] sm:$0xff]
    %v1612 = vld [vmem:[%s5 + $0x38] sm:$0xff]
    %v1621 = vunpack.c.l.b16 %v1605
    %v1622 = vunpack.c.h.b16 %v1605
    %v1623 = vunpack.c.l.b16 %v1606
    %v1624 = vunpack.c.h.b16 %v1606
    %v1625 = vunpack.c.l.b16 %v1607
    %v1626 = vunpack.c.h.b16 %v1607
    %v1627 = vunpack.c.l.b16 %v1608
    %v1628 = vunpack.c.h.b16 %v1608
    %v1629 = vunpack.c.l.b16 %v1609
    %v1630 = vunpack.c.h.b16 %v1609
    %v1631 = vunpack.c.l.b16 %v1610
    %v1632 = vunpack.c.h.b16 %v1610
    %v1633 = vunpack.c.l.b16 %v1611
    %v1634 = vunpack.c.h.b16 %v1611
    %v1635 = vunpack.c.l.b16 %v1612
    %v1636 = vunpack.c.h.b16 %v1612
    %v1637 = vpack.c.b16 %v1623, %v1621
    %v1638 = vpack.c.b16 %v1624, %v1622
    %v1639 = vpack.c.b16 %v1627, %v1625
    %v1640 = vpack.c.b16 %v1628, %v1626
    %v1641 = vpack.c.b16 %v1631, %v1629
    %v1642 = vpack.c.b16 %v1632, %v1630
    %v1643 = vpack.c.b16 %v1635, %v1633
    %v1644 = vpack.c.b16 %v1636, %v1634
    %v1654 = vsel %vm91, %v1603, 0
    %v1657 = vsel %vm91, %v1604, 0
    %1659 = vmatprep.subr.bf16.mxu0 0
    %1660 = vmatpush1.bf16.msra.mxu0 0
    %1661 = vmatprep.subr.bf16.mxu0 0
    %1662 = vmatpush1.bf16.msra.mxu0 0
    %1663 = vmatprep.subr.bf16.mxu0 0
    %1664 = vmatpush1.bf16.msra.mxu0 0
    %1665 = vmatprep.subr.bf16.mxu0 0
    %1666 = vmatpush1.bf16.msra.mxu0 0
    %1667 = vmatprep.subr.bf16.mxu0 %v1644
    %1668 = vmatpush1.bf16.msra.mxu0 %v1643
    %1669 = vmatprep.subr.bf16.mxu0 %v1642
    %1670 = vmatpush1.bf16.msra.mxu0 %v1641
    %1671 = vmatprep.subr.bf16.mxu0 %v1640
    %1672 = vmatpush1.bf16.msra.mxu0 %v1639
    %1673 = vmatprep.subr.bf16.mxu0 %v1638
    %1674 = vmatpush1.bf16.msra.mxu0 %v1637
    %1675 = vmatprep.subr.bf16.mxu0 0
    %1676 = vmatpush2.bf16.msra.mxu0 0
    %1677 = vmatprep.subr.bf16.mxu0 0
    %1678 = vmatpush2.bf16.msra.mxu0 0
    %1679 = vmatprep.subr.bf16.mxu0 0
    %1680 = vmatpush2.bf16.msra.mxu0 0
    %1681 = vmatprep.subr.bf16.mxu0 0
    %1682 = vmatpush2.bf16.msra.mxu0 0
    %1683 = vmatprep.subr.bf16.mxu0 0
    %1684 = vmatpush2.bf16.msra.mxu0 0
    %1685 = vmatprep.subr.bf16.mxu0 0
    %1686 = vmatpush2.bf16.msra.mxu0 0
    %1687 = vmatprep.subr.bf16.mxu0 0
    %1688 = vmatpush2.bf16.msra.mxu0 0
    %1689 = vmatprep.subr.bf16.mxu0 0
    %1690 = vmatpush2.bf16.msra.mxu0 0
    %1691 = vmatprep.mubr.bf16.mxu0 0
    %1692 = vmatmul.mubr.bf16.gmra.mxu0 %v1654
    %v1693 = vpop.f32.mrf.mxu0
    %v1694 = vadd.f32 0.0, %v1693
    %v1695 = vpop.f32.mrf.mxu0
    %v1696 = vadd.f32 0.0, %v1695
    %v1697 = vpop.f32.mrf.mxu0
    %v1698 = vadd.f32 0.0, %v1697
    %v1699 = vpop.f32.mrf.mxu0
    %v1700 = vadd.f32 0.0, %v1699
    %1701 = vmatprep.mubr.bf16.mxu0 0
    %1702 = vmatmul.mubr.bf16.gmra.mxu0 %v1657
    %v1703 = vpop.f32.mrf.mxu0
    %v1704 = vadd.f32 0.0, %v1703
    %v1705 = vpop.f32.mrf.mxu0
    %v1706 = vadd.f32 0.0, %v1705
    %v1707 = vpop.f32.mrf.mxu0
    %v1708 = vadd.f32 0.0, %v1707
    %v1709 = vpop.f32.mrf.mxu0
    %v1710 = vadd.f32 0.0, %v1709
    %1711 = vdwg.mxu0
    %v1712 = vmul.f32 %v1694, %v1694
    %v1713 = vmul.f32 %v1696, %v1696
    %v1714 = vmul.f32 %v1698, %v1698
    %v1715 = vmul.f32 %v1700, %v1700
    %v1716 = vmul.f32 %v1704, %v1704
    %v1717 = vmul.f32 %v1706, %v1706
    %v1718 = vmul.f32 %v1708, %v1708
    %v1719 = vmul.f32 %v1710, %v1710
    %v1720 = vmul.f32 %v1694, %v1712
    %v1721 = vmul.f32 %v1696, %v1713
    %v1722 = vmul.f32 %v1698, %v1714
    %v1723 = vmul.f32 %v1700, %v1715
    %v1724 = vmul.f32 %v1704, %v1716
    %v1725 = vmul.f32 %v1706, %v1717
    %v1726 = vmul.f32 %v1708, %v1718
    %v1727 = vmul.f32 %v1710, %v1719
    %v1728 = vmul.f32 %v1720, 0.044715
    %v1729 = vmul.f32 %v1721, 0.044715
    %v1730 = vmul.f32 %v1722, 0.044715
    %v1731 = vmul.f32 %v1723, 0.044715
    %v1732 = vmul.f32 %v1724, 0.044715
    %v1733 = vmul.f32 %v1725, 0.044715
    %v1734 = vmul.f32 %v1726, 0.044715
    %v1735 = vmul.f32 %v1727, 0.044715
    %v1736 = vadd.f32 %v1694, %v1728
    %v1737 = vadd.f32 %v1696, %v1729
    %v1738 = vadd.f32 %v1698, %v1730
    %v1739 = vadd.f32 %v1700, %v1731
    %v1740 = vadd.f32 %v1704, %v1732
    %v1741 = vadd.f32 %v1706, %v1733
    %v1742 = vadd.f32 %v1708, %v1734
    %v1743 = vadd.f32 %v1710, %v1735
    %v1744 = vmul.f32 %v1736, 0.7978846
    %v1745 = vmul.f32 %v1737, 0.7978846
    %v1746 = vmul.f32 %v1738, 0.7978846
    %v1747 = vmul.f32 %v1739, 0.7978846
    %v1748 = vmul.f32 %v1740, 0.7978846
    %v1749 = vmul.f32 %v1741, 0.7978846
    %v1750 = vmul.f32 %v1742, 0.7978846
    %v1751 = vmul.f32 %v1743, 0.7978846
    %v1752 = vtanh.pop %v1744
    %v1753 = vtanh.pop %v1745
    %v1754 = vtanh.pop %v1746
    %v1755 = vtanh.pop %v1747
    %v1756 = vtanh.pop %v1748
    %v1757 = vtanh.pop %v1749
    %v1758 = vtanh.pop %v1750
    %v1759 = vtanh.pop %v1751
    %v1760 = vadd.f32 %v1752, 1.0
    %v1761 = vadd.f32 %v1753, 1.0
    %v1762 = vadd.f32 %v1754, 1.0
    %v1763 = vadd.f32 %v1755, 1.0
    %v1764 = vadd.f32 %v1756, 1.0
    %v1765 = vadd.f32 %v1757, 1.0
    %v1766 = vadd.f32 %v1758, 1.0
    %v1767 = vadd.f32 %v1759, 1.0
    %v1768 = vmul.f32 %v1760, 0.5
    %v1769 = vmul.f32 %v1761, 0.5
    %v1770 = vmul.f32 %v1762, 0.5
    %v1771 = vmul.f32 %v1763, 0.5
    %v1772 = vmul.f32 %v1764, 0.5
    %v1773 = vmul.f32 %v1765, 0.5
    %v1774 = vmul.f32 %v1766, 0.5
    %v1775 = vmul.f32 %v1767, 0.5
    %v1776 = vmul.f32 %v1694, %v1768
    %v1777 = vmul.f32 %v1696, %v1769
    %v1778 = vmul.f32 %v1698, %v1770
    %v1779 = vmul.f32 %v1700, %v1771
    %v1780 = vmul.f32 %v1704, %v1772
    %v1781 = vmul.f32 %v1706, %v1773
    %v1782 = vmul.f32 %v1708, %v1774
    %v1783 = vmul.f32 %v1710, %v1775
    %v1784 = vpack.c.bf16 %v1778, %v1776
    %v1785 = vpack.c.bf16 %v1779, %v1777
    %v1786 = vpack.c.bf16 %v1782, %v1780
    %v1787 = vpack.c.bf16 %v1783, %v1781
    %v1788 = vld [vmem:[%s6] sm:$0xf]
    %v1789 = vld [vmem:[%s6 + $0x4] sm:$0xf]
    %v1790 = vld [vmem:[%s6 + $0x8] sm:$0xf]
    %v1791 = vld [vmem:[%s6 + $0xc] sm:$0xf]
    %v1792 = vld [vmem:[%s6 + $0x10] sm:$0xf]
    %v1793 = vld [vmem:[%s6 + $0x14] sm:$0xf]
    %v1794 = vld [vmem:[%s6 + $0x18] sm:$0xf]
    %v1795 = vld [vmem:[%s6 + $0x1c] sm:$0xf]
    %v1796 = vld [vmem:[%s6 + $0x20] sm:$0xf]
    %v1797 = vld [vmem:[%s6 + $0x24] sm:$0xf]
    %v1798 = vld [vmem:[%s6 + $0x28] sm:$0xf]
    %v1799 = vld [vmem:[%s6 + $0x2c] sm:$0xf]
    %v1800 = vld [vmem:[%s6 + $0x30] sm:$0xf]
    %v1801 = vld [vmem:[%s6 + $0x34] sm:$0xf]
    %v1802 = vld [vmem:[%s6 + $0x38] sm:$0xf]
    %v1803 = vld [vmem:[%s6 + $0x3c] sm:$0xf]
    %v1804 = vld [vmem:[%s6 + $0x40] sm:$0xf]
    %v1805 = vld [vmem:[%s6 + $0x44] sm:$0xf]
    %v1806 = vld [vmem:[%s6 + $0x48] sm:$0xf]
    %v1807 = vld [vmem:[%s6 + $0x4c] sm:$0xf]
    %v1808 = vld [vmem:[%s6 + $0x50] sm:$0xf]
    %v1809 = vld [vmem:[%s6 + $0x54] sm:$0xf]
    %v1810 = vld [vmem:[%s6 + $0x58] sm:$0xf]
    %v1811 = vld [vmem:[%s6 + $0x5c] sm:$0xf]
    %v1812 = vld [vmem:[%s6 + $0x60] sm:$0xf]
    %v1813 = vld [vmem:[%s6 + $0x64] sm:$0xf]
    %v1814 = vld [vmem:[%s6 + $0x68] sm:$0xf]
    %v1815 = vld [vmem:[%s6 + $0x6c] sm:$0xf]
    %v1816 = vld [vmem:[%s6 + $0x70] sm:$0xf]
    %v1817 = vld [vmem:[%s6 + $0x74] sm:$0xf]
    %v1818 = vld [vmem:[%s6 + $0x78] sm:$0xf]
    %v1819 = vld [vmem:[%s6 + $0x7c] sm:$0xf]
    %v1852 = vunpack.c.l.b16 %v1788
    %v1853 = vunpack.c.l.b16 %v1789
    %v1854 = vunpack.c.l.b16 %v1790
    %v1855 = vunpack.c.l.b16 %v1791
    %v1856 = vunpack.c.l.b16 %v1792
    %v1857 = vunpack.c.l.b16 %v1793
    %v1858 = vunpack.c.l.b16 %v1794
    %v1859 = vunpack.c.l.b16 %v1795
    %v1860 = vunpack.c.l.b16 %v1796
    %v1861 = vunpack.c.l.b16 %v1797
    %v1862 = vunpack.c.l.b16 %v1798
    %v1863 = vunpack.c.l.b16 %v1799
    %v1864 = vunpack.c.l.b16 %v1800
    %v1865 = vunpack.c.l.b16 %v1801
    %v1866 = vunpack.c.l.b16 %v1802
    %v1867 = vunpack.c.l.b16 %v1803
    %v1868 = vunpack.c.l.b16 %v1804
    %v1869 = vunpack.c.l.b16 %v1805
    %v1870 = vunpack.c.l.b16 %v1806
    %v1871 = vunpack.c.l.b16 %v1807
    %v1872 = vunpack.c.l.b16 %v1808
    %v1873 = vunpack.c.l.b16 %v1809
    %v1874 = vunpack.c.l.b16 %v1810
    %v1875 = vunpack.c.l.b16 %v1811
    %v1876 = vunpack.c.l.b16 %v1812
    %v1877 = vunpack.c.l.b16 %v1813
    %v1878 = vunpack.c.l.b16 %v1814
    %v1879 = vunpack.c.l.b16 %v1815
    %v1880 = vunpack.c.l.b16 %v1816
    %v1881 = vunpack.c.l.b16 %v1817
    %v1882 = vunpack.c.l.b16 %v1818
    %v1883 = vunpack.c.l.b16 %v1819
    %v1884 = vpack.c.b16 %v1853, %v1852
    %v1885 = vpack.c.b16 %v1855, %v1854
    %v1886 = vpack.c.b16 %v1857, %v1856
    %v1887 = vpack.c.b16 %v1859, %v1858
    %v1888 = vpack.c.b16 %v1861, %v1860
    %v1889 = vpack.c.b16 %v1863, %v1862
    %v1890 = vpack.c.b16 %v1865, %v1864
    %v1891 = vpack.c.b16 %v1867, %v1866
    %v1892 = vpack.c.b16 %v1869, %v1868
    %v1893 = vpack.c.b16 %v1871, %v1870
    %v1894 = vpack.c.b16 %v1873, %v1872
    %v1895 = vpack.c.b16 %v1875, %v1874
    %v1896 = vpack.c.b16 %v1877, %v1876
    %v1897 = vpack.c.b16 %v1879, %v1878
    %v1898 = vpack.c.b16 %v1881, %v1880
    %v1899 = vpack.c.b16 %v1883, %v1882
    %1916 = vmatprep.subr.bf16.mxu0 0
    %1917 = vmatpush1.bf16.msra.mxu0 %v1891
    %1918 = vmatprep.subr.bf16.mxu0 0
    %1919 = vmatpush1.bf16.msra.mxu0 %v1890
    %1920 = vmatprep.subr.bf16.mxu0 0
    %1921 = vmatpush1.bf16.msra.mxu0 %v1889
    %1922 = vmatprep.subr.bf16.mxu0 0
    %1923 = vmatpush1.bf16.msra.mxu0 %v1888
    %1924 = vmatprep.subr.bf16.mxu0 0
    %1925 = vmatpush1.bf16.msra.mxu0 %v1887
    %1926 = vmatprep.subr.bf16.mxu0 0
    %1927 = vmatpush1.bf16.msra.mxu0 %v1886
    %1928 = vmatprep.subr.bf16.mxu0 0
    %1929 = vmatpush1.bf16.msra.mxu0 %v1885
    %1930 = vmatprep.subr.bf16.mxu0 0
    %1931 = vmatpush1.bf16.msra.mxu0 %v1884
    %1932 = vmatprep.subr.bf16.mxu0 0
    %1933 = vmatpush2.bf16.msra.mxu0 %v1899
    %1934 = vmatprep.subr.bf16.mxu0 0
    %1935 = vmatpush2.bf16.msra.mxu0 %v1898
    %1936 = vmatprep.subr.bf16.mxu0 0
    %1937 = vmatpush2.bf16.msra.mxu0 %v1897
    %1938 = vmatprep.subr.bf16.mxu0 0
    %1939 = vmatpush2.bf16.msra.mxu0 %v1896
    %1940 = vmatprep.subr.bf16.mxu0 0
    %1941 = vmatpush2.bf16.msra.mxu0 %v1895
    %1942 = vmatprep.subr.bf16.mxu0 0
    %1943 = vmatpush2.bf16.msra.mxu0 %v1894
    %1944 = vmatprep.subr.bf16.mxu0 0
    %1945 = vmatpush2.bf16.msra.mxu0 %v1893
    %1946 = vmatprep.subr.bf16.mxu0 0
    %1947 = vmatpush2.bf16.msra.mxu0 %v1892
    %1948 = vmatprep.mubr.bf16.mxu0 %v1785
    %1949 = vmatmul.mubr.bf16.gmra.mxu0 %v1784
    %v1950 = vpop.f32.mrf.mxu0
    %v1951 = vadd.f32 0.0, %v1950
    %v1952 = vpop.f32.mrf.mxu0
    %v1953 = vpop.f32.mrf.mxu0
    %v1954 = vadd.f32 0.0, %v1953
    %v1955 = vpop.f32.mrf.mxu0
    %1956 = vmatprep.mubr.bf16.mxu0 %v1787
    %1957 = vmatmul.mubr.bf16.gmra.mxu0 %v1786
    %v1958 = vpop.f32.mrf.mxu0
    %v1959 = vadd.f32 0.0, %v1958
    %v1960 = vpop.f32.mrf.mxu0
    %v1961 = vpop.f32.mrf.mxu0
    %v1962 = vadd.f32 0.0, %v1961
    %v1963 = vpop.f32.mrf.mxu0
    %1964 = vdwg.mxu0
    %v1965 = vadd.f32 %v1567, %v1951
    %v1966 = vadd.f32 %v1568, %v1954
    %v1967 = vadd.f32 %v1569, %v1959
    %v1968 = vadd.f32 %v1570, %v1962
    %1969 = vst.msk [vmem:[#allocation10] sm:$0xff] %vm91, %v1965
    %1970 = vst.msk [vmem:[#allocation10 + $0x8] sm:$0xff] %vm91, %v1966
    %1971 = vst.msk [vmem:[#allocation10 + $0x10] sm:$0xff] %vm91, %v1967
    %1972 = vst.msk [vmem:[#allocation10 + $0x18] sm:$0xff] %vm91, %v1968
    // Predicated region
    $region46: #{transformer_block.1} parent=1 // pred_check
      _
    $region47: #{transformer_block.1} parent=1 // pred_check_branch
      %1974 = sbr.rel (0) target = $region49
    $region48: #{transformer_block.1} parent=1 // pred_region
      %s1976 = ssub.s32 512, 512
      %1977 = vsyncadd [#allocation4], %s1976
      %s1978 = sshll.u32 [#allocation10], 4
      %s1979 = int_to_ptr.vmem [resolvable:$true] %s1978
      %1984 = dma.vmem_to_hbm [thread:$0]  %s1979, 512, %s7, [#allocation4], 128, 128, 8
    $region49: #{transformer_block.1} parent=1 // pred_fallthru
      _
    // Predicated region
    $region50: #{transformer_block.1} parent=1 // pred_check
      _
    $region51: #{transformer_block.1} parent=1 // pred_check_branch
      %1986 = sbr.rel (0) target = $region53
    $region52: #{transformer_block.1} parent=1 // pred_region
      %1987 = dma.done [#allocation4], 512
    $region53: #{transformer_block.1} parent=1 // pred_fallthru
      _
    %1988 = vsyncpa [#allocation3], 1
    %1989 = vsyncpa [#allocation6], 1
    %1990 = vsyncpa [#allocation9], 1
    %1991 = vsyncpa [#allocation4], 1

</llo_original>
